<compile_context>
chip_gen: v6e
topology: v6e:2x2x1
jax: 0.10.0
libtpu: 0.0.40
codegen_flags: <defaults>
</compile_context>

<pallas_src>
import functools

import jax
import jax.numpy as jnp
from jax import lax
from jax.experimental import pallas as pl
from jax.experimental.pallas import tpu as pltpu


def _conv_mean_pool_kernel(ph_ref, w_ref, b_ref, o_ref, col_ref, *,
                           Ho, Wo, Cin, Cout, k, nb):
    # ph_ref : (nb, 4, Ho+pad, Wo+pad, Cin)  polyphase-split padded input, phase p = ry*2+rx
    # w_ref  : (Cout, K)                     pool-folded stride-2 conv weights, K = (k+1)^2*Cin
    # b_ref  : (Cout, 1)                     bias (f32), added after pooling (exact)
    # o_ref  : (1, Cout, nb*Ho*Wo)           lane-dense output block
    # col_ref: (nb*Ho*Wo, K)                 VMEM scratch im2col slab
    k1 = k + 1
    M = Ho * Wo

    # Build the im2col slab with direct scratch stores: every tap read is a unit-stride slice
    # of the right parity plane; nothing stays live across iterations (no concat chain).
    for b in range(nb):
        for dy in range(k1):
            for dx in range(k1):
                p = (dy % 2) * 2 + (dx % 2)
                tap = dy * k1 + dx
                sl = ph_ref[b, p, pl.ds(dy // 2, Ho), pl.ds(dx // 2, Wo), :]   # (Ho, Wo, Cin)
                # (Ho, Wo, Cin) -> (Ho*Wo, Cin) is layout-preserving when Wo % 8 == 0.
                col_ref[pl.ds(b * M, M), pl.ds(tap * Cin, Cin)] = sl.reshape(M, Cin)

    # One fused MXU matmul: (Cout, K) x (nb*Ho*Wo, K)^T -> (Cout, nb*Ho*Wo), f32 accumulation.
    acc = lax.dot_general(
        w_ref[...], col_ref[...],
        dimension_numbers=(((1,), (1,)), ((), ())),
        preferred_element_type=jnp.float32,
    )
    acc = acc + b_ref[...]                     # bias once, after pooling
    o_ref[0] = acc.astype(o_ref.dtype)


def _round_up(x, m):
    return -(-x // m) * m


def _vmem_bytes_estimate(nb, *, Hph, Wph, Cin, Cout, Ho, Wo, K, in_bytes, out_bytes):
    # Conservative VMEM accounting including (8,128) tile padding and double-buffering.
    lane, sub = 128, 8
    m = nb * Ho * Wo
    phases = nb * 4 * Hph * _round_up(Wph, sub) * _round_up(Cin, lane) * in_bytes
    col = _round_up(m, sub) * _round_up(K, lane) * in_bytes
    w = _round_up(Cout, sub) * _round_up(K, lane) * in_bytes
    bias = sub * lane * 4
    out = _round_up(Cout, sub) * _round_up(m, lane) * out_bytes
    acc = _round_up(Cout, sub) * _round_up(m, lane) * 4
    return 2 * (phases + w + bias + out) + col + acc


def _pick_batch_block(N, Ho, Wo, est_fn, budget):
    divisors = [d for d in range(1, N + 1) if N % d == 0]
    fitting = [d for d in divisors if est_fn(d) <= budget] or [1]

    def score(d):
        lanes = d * Ho * Wo
        # lane-dense stores (mult of 128) > >=128 lanes > >=2 grid steps (v7x megacore) > size.
        return (lanes % 128 == 0, lanes >= 128, N // d >= 2, d)

    return max(fitting, key=score)


def conv_mean_pool(x_nchw, weight_oihw, bias):
    """ConvMeanPool forward: (N, Cin, H, W) -> (N, Cout, H//2, W//2)."""
    N, Cin, H, W = x_nchw.shape
    Cout, Cin2, k, k2 = weight_oihw.shape
    assert Cin2 == Cin and k2 == k
    assert k % 2 == 1, "odd kernel size assumed ('same' padding, as in the module)"
    assert H % 2 == 0 and W % 2 == 0, "2x2 mean pool assumes even spatial dims"
    pad = (k - 1) // 2
    Ho, Wo = H // 2, W // 2
    k1 = k + 1
    K = k1 * k1 * Cin
    compute_dtype = x_nchw.dtype
    out_dtype = x_nchw.dtype

    # ---------------- XLA-side glue (layout only) ----------------
    # NCHW -> NHWC, 'same' pad, then polyphase split: all stride-2 access is done here so
    # every in-kernel read is unit-stride.
    x_nhwc = jnp.transpose(x_nchw, (0, 2, 3, 1))
    x_pad = jnp.pad(x_nhwc, ((0, 0), (pad, pad), (pad, pad), (0, 0)))
    Hph, Wph = Ho + pad, Wo + pad           # every parity plane has exactly this extent
    phases = jnp.stack(
        [x_pad[:, ry::2, rx::2, :] for ry in (0, 1) for rx in (0, 1)], axis=1
    ).astype(compute_dtype)                 # (N, 4, Hph, Wph, Cin)

    # Fold the 2x2 mean pool into the conv: mean-pooling a stride-1 kxk conv equals a stride-2
    # (k+1)x(k+1) conv whose kernel is the 0.25-scaled sum of the four shifted kxk kernels.
    w_t = jnp.transpose(weight_oihw, (0, 2, 3, 1)).astype(jnp.float32)   # (Cout, k, k, Cin)
    w_eff = jnp.zeros((Cout, k1, k1, Cin), jnp.float32)
    for dh in (0, 1):
        for dw in (0, 1):
            w_eff = w_eff.at[:, dh:dh + k, dw:dw + k, :].add(w_t)
    # Operands follow the input dtype (bf16 -> full MXU rate); accumulation stays f32.
    w2 = (0.25 * w_eff).reshape(Cout, K).astype(compute_dtype)
    b2 = bias.astype(jnp.float32).reshape(Cout, 1)

    # ---------------- batch blocking ----------------
    in_bytes = jnp.dtype(compute_dtype).itemsize
    out_bytes = jnp.dtype(out_dtype).itemsize
    est = functools.partial(_vmem_bytes_estimate, Hph=Hph, Wph=Wph, Cin=Cin, Cout=Cout,
                            Ho=Ho, Wo=Wo, K=K, in_bytes=in_bytes, out_bytes=out_bytes)
    nb = _pick_batch_block(N, Ho, Wo, est, budget=32 * 1024 * 1024)
    grid_n = N // nb
    M = nb * Ho * Wo

    kernel = functools.partial(_conv_mean_pool_kernel,
                               Ho=Ho, Wo=Wo, Cin=Cin, Cout=Cout, k=k, nb=nb)

    out = pl.pallas_call(
        kernel,
        out_shape=jax.ShapeDtypeStruct((grid_n, Cout, M), out_dtype),
        grid_spec=pltpu.PrefetchScalarGridSpec(
            num_scalar_prefetch=0,
            grid=(grid_n,),
            in_specs=[
                pl.BlockSpec((nb, 4, Hph, Wph, Cin), lambda n: (n, 0, 0, 0, 0)),
                pl.BlockSpec((Cout, K), lambda n: (0, 0)),
                pl.BlockSpec((Cout, 1), lambda n: (0, 0)),
            ],
            out_specs=pl.BlockSpec((1, Cout, M), lambda n: (n, 0, 0)),
            scratch_shapes=[pltpu.VMEM((M, K), compute_dtype)],
        ),
        compiler_params=pltpu.CompilerParams(
            dimension_semantics=("parallel",),
            # Above v5e's 16 MiB scoped default, below v7x's 64 MiB physical VMEM.
            vmem_limit_bytes=48 * 1024 * 1024,
        ),
    )(phases, w2, b2)

    # (grid_n, Cout, nb*Ho*Wo) -> (N, Cout, Ho, Wo): tiny pooled output, cheap glue.
    out = out.reshape(grid_n, Cout, nb, Ho, Wo)
    out = jnp.transpose(out, (0, 2, 1, 3, 4)).reshape(N, Cout, Ho, Wo)
    return out


def _reference(x_nchw, weight_oihw, bias):
    k = weight_oihw.shape[-1]
    pad = (k - 1) // 2
    out = lax.conv_general_dilated(
        x_nchw, weight_oihw,
        window_strides=(1, 1),
        padding=((pad, pad), (pad, pad)),
        dimension_numbers=("NCHW", "OIHW", "NCHW"),
    ) + bias.reshape(1, -1, 1, 1)
    return (out[:, :, ::2, ::2] + out[:, :, 1::2, ::2]
            + out[:, :, ::2, 1::2] + out[:, :, 1::2, 1::2]) / 4.0


if __name__ == "__main__":
    # Small shapes consistent with ConvMeanPool(n_input=4, n_output=8, k_size=3).
    N, Cin, H, W = 2, 4, 16, 16
    Cout, k = 8, 3

    key = jax.random.PRNGKey(0)
    kx, kw, kb = jax.random.split(key, 3)

    x = jax.random.normal(kx, (N, Cin, H, W), dtype=jnp.float32)

    # Deterministic params mirroring the module __init__:
    # kaiming_uniform_(fan_in, relu): U(-b, b), b = sqrt(2)*sqrt(3/fan_in), fan_in = Cin*k*k
    fan_in = Cin * k * k
    w_bound = (2.0 ** 0.5) * (3.0 / fan_in) ** 0.5
    weight = jax.random.uniform(kw, (Cout, Cin, k, k), jnp.float32, -w_bound, w_bound)
    # default Conv2d bias init: U(-1/sqrt(fan_in), 1/sqrt(fan_in))
    b_bound = 1.0 / (fan_in ** 0.5)
    bias = jax.random.uniform(kb, (Cout,), jnp.float32, -b_bound, b_bound)

    out = jax.block_until_ready(conv_mean_pool(x, weight, bias))

    ref = _reference(x, weight, bias)
    assert out.shape == (N, Cout, H // 2, W // 2)
    assert jnp.allclose(out, ref, rtol=1e-5, atol=1e-5), "mismatch vs reference"

    print("KERNEL_OK")
</pallas_src>

<mosaic_0001>
module attributes {stable_mosaic.version = 11 : i64} {
  func.func @_conv_mean_pool_kernel(%arg0: i32, %arg1: memref<2x4x9x9x4xf32, #tpu.memory_space<vmem>>, %arg2: memref<8x64xf32, #tpu.memory_space<vmem>>, %arg3: memref<8x1xf32, #tpu.memory_space<vmem>>, %arg4: memref<1x8x128xf32, #tpu.memory_space<vmem>>, %arg5: memref<128x64xf32, #tpu.memory_space<vmem>>) attributes {dimension_semantics = [#tpu.dimension_semantics<parallel>], iteration_bounds = array<i64: 1>, scalar_prefetch = 0 : i64, scratch_operands = 1 : i64, tpu.core_type = #tpu.core_type<tc>, window_params = [{transform_indices = @transform_0, window_bounds = array<i64: 2, 4, 9, 9, 4>}, {pipeline_mode = #tpu.pipeline_mode<synchronous>, transform_indices = @transform_1, window_bounds = array<i64: 8, 64>}, {pipeline_mode = #tpu.pipeline_mode<synchronous>, transform_indices = @transform_2, window_bounds = array<i64: 8, 1>}, {transform_indices = @transform_3, window_bounds = array<i64: 1, 8, 128>}]} {
    %c0 = arith.constant 0 : index
    %c0_0 = arith.constant 0 : index
    %c0_1 = arith.constant 0 : index
    %c0_2 = arith.constant 0 : index
    %c0_3 = arith.constant 0 : index
    %0 = vector.load %arg1[%c0, %c0_0, %c0_1, %c0_2, %c0_3] : memref<2x4x9x9x4xf32, #tpu.memory_space<vmem>>, vector<1x1x8x8x4xf32>
    %1 = vector.shape_cast %0 : vector<1x1x8x8x4xf32> to vector<8x8x4xf32>
    %2 = vector.shape_cast %1 : vector<8x8x4xf32> to vector<64x4xf32>
    %c0_4 = arith.constant 0 : index
    %c0_5 = arith.constant 0 : index
    %3 = vector.load %arg5[%c0_4, %c0_5] : memref<128x64xf32, #tpu.memory_space<vmem>>, vector<64x4xf32>
    tpu.vector_store %arg5[%c0_4, %c0_5], %2 {strides = array<i32>} : memref<128x64xf32, #tpu.memory_space<vmem>>, vector<64x4xf32>,
    %c0_6 = arith.constant 0 : index
    %c1 = arith.constant 1 : index
    %c0_7 = arith.constant 0 : index
    %c0_8 = arith.constant 0 : index
    %c0_9 = arith.constant 0 : index
    %4 = vector.load %arg1[%c0_6, %c1, %c0_7, %c0_8, %c0_9] : memref<2x4x9x9x4xf32, #tpu.memory_space<vmem>>, vector<1x1x8x8x4xf32>
    %5 = vector.shape_cast %4 : vector<1x1x8x8x4xf32> to vector<8x8x4xf32>
    %6 = vector.shape_cast %5 : vector<8x8x4xf32> to vector<64x4xf32>
    %c0_10 = arith.constant 0 : index
    %c4 = arith.constant 4 : index
    %7 = vector.load %arg5[%c0_10, %c4] : memref<128x64xf32, #tpu.memory_space<vmem>>, vector<64x4xf32>
    tpu.vector_store %arg5[%c0_10, %c4], %6 {strides = array<i32>} : memref<128x64xf32, #tpu.memory_space<vmem>>, vector<64x4xf32>,
    %c0_11 = arith.constant 0 : index
    %c0_12 = arith.constant 0 : index
    %c0_13 = arith.constant 0 : index
    %c1_14 = arith.constant 1 : index
    %c0_15 = arith.constant 0 : index
    %8 = vector.load %arg1[%c0_11, %c0_12, %c0_13, %c1_14, %c0_15] : memref<2x4x9x9x4xf32, #tpu.memory_space<vmem>>, vector<1x1x8x8x4xf32>
    %9 = vector.shape_cast %8 : vector<1x1x8x8x4xf32> to vector<8x8x4xf32>
    %10 = vector.shape_cast %9 : vector<8x8x4xf32> to vector<64x4xf32>
    %c0_16 = arith.constant 0 : index
    %c8 = arith.constant 8 : index
    %11 = vector.load %arg5[%c0_16, %c8] : memref<128x64xf32, #tpu.memory_space<vmem>>, vector<64x4xf32>
    tpu.vector_store %arg5[%c0_16, %c8], %10 {strides = array<i32>} : memref<128x64xf32, #tpu.memory_space<vmem>>, vector<64x4xf32>,
    %c0_17 = arith.constant 0 : index
    %c1_18 = arith.constant 1 : index
    %c0_19 = arith.constant 0 : index
    %c1_20 = arith.constant 1 : index
    %c0_21 = arith.constant 0 : index
    %12 = vector.load %arg1[%c0_17, %c1_18, %c0_19, %c1_20, %c0_21] : memref<2x4x9x9x4xf32, #tpu.memory_space<vmem>>, vector<1x1x8x8x4xf32>
    %13 = vector.shape_cast %12 : vector<1x1x8x8x4xf32> to vector<8x8x4xf32>
    %14 = vector.shape_cast %13 : vector<8x8x4xf32> to vector<64x4xf32>
    %c0_22 = arith.constant 0 : index
    %c12 = arith.constant 12 : index
    %15 = vector.load %arg5[%c0_22, %c12] : memref<128x64xf32, #tpu.memory_space<vmem>>, vector<64x4xf32>
    tpu.vector_store %arg5[%c0_22, %c12], %14 {strides = array<i32>} : memref<128x64xf32, #tpu.memory_space<vmem>>, vector<64x4xf32>,
    %c0_23 = arith.constant 0 : index
    %c2 = arith.constant 2 : index
    %c0_24 = arith.constant 0 : index
    %c0_25 = arith.constant 0 : index
    %c0_26 = arith.constant 0 : index
    %16 = vector.load %arg1[%c0_23, %c2, %c0_24, %c0_25, %c0_26] : memref<2x4x9x9x4xf32, #tpu.memory_space<vmem>>, vector<1x1x8x8x4xf32>
    %17 = vector.shape_cast %16 : vector<1x1x8x8x4xf32> to vector<8x8x4xf32>
    %18 = vector.shape_cast %17 : vector<8x8x4xf32> to vector<64x4xf32>
    %c0_27 = arith.constant 0 : index
    %c16 = arith.constant 16 : index
    %19 = vector.load %arg5[%c0_27, %c16] : memref<128x64xf32, #tpu.memory_space<vmem>>, vector<64x4xf32>
    tpu.vector_store %arg5[%c0_27, %c16], %18 {strides = array<i32>} : memref<128x64xf32, #tpu.memory_space<vmem>>, vector<64x4xf32>,
    %c0_28 = arith.constant 0 : index
    %c3 = arith.constant 3 : index
    %c0_29 = arith.constant 0 : index
    %c0_30 = arith.constant 0 : index
    %c0_31 = arith.constant 0 : index
    %20 = vector.load %arg1[%c0_28, %c3, %c0_29, %c0_30, %c0_31] : memref<2x4x9x9x4xf32, #tpu.memory_space<vmem>>, vector<1x1x8x8x4xf32>
    %21 = vector.shape_cast %20 : vector<1x1x8x8x4xf32> to vector<8x8x4xf32>
    %22 = vector.shape_cast %21 : vector<8x8x4xf32> to vector<64x4xf32>
    %c0_32 = arith.constant 0 : index
    %c20 = arith.constant 20 : index
    %23 = vector.load %arg5[%c0_32, %c20] : memref<128x64xf32, #tpu.memory_space<vmem>>, vector<64x4xf32>
    tpu.vector_store %arg5[%c0_32, %c20], %22 {strides = array<i32>} : memref<128x64xf32, #tpu.memory_space<vmem>>, vector<64x4xf32>,
    %c0_33 = arith.constant 0 : index
    %c2_34 = arith.constant 2 : index
    %c0_35 = arith.constant 0 : index
    %c1_36 = arith.constant 1 : index
    %c0_37 = arith.constant 0 : index
    %24 = vector.load %arg1[%c0_33, %c2_34, %c0_35, %c1_36, %c0_37] : memref<2x4x9x9x4xf32, #tpu.memory_space<vmem>>, vector<1x1x8x8x4xf32>
    %25 = vector.shape_cast %24 : vector<1x1x8x8x4xf32> to vector<8x8x4xf32>
    %26 = vector.shape_cast %25 : vector<8x8x4xf32> to vector<64x4xf32>
    %c0_38 = arith.constant 0 : index
    %c24 = arith.constant 24 : index
    %27 = vector.load %arg5[%c0_38, %c24] : memref<128x64xf32, #tpu.memory_space<vmem>>, vector<64x4xf32>
    tpu.vector_store %arg5[%c0_38, %c24], %26 {strides = array<i32>} : memref<128x64xf32, #tpu.memory_space<vmem>>, vector<64x4xf32>,
    %c0_39 = arith.constant 0 : index
    %c3_40 = arith.constant 3 : index
    %c0_41 = arith.constant 0 : index
    %c1_42 = arith.constant 1 : index
    %c0_43 = arith.constant 0 : index
    %28 = vector.load %arg1[%c0_39, %c3_40, %c0_41, %c1_42, %c0_43] : memref<2x4x9x9x4xf32, #tpu.memory_space<vmem>>, vector<1x1x8x8x4xf32>
    %29 = vector.shape_cast %28 : vector<1x1x8x8x4xf32> to vector<8x8x4xf32>
    %30 = vector.shape_cast %29 : vector<8x8x4xf32> to vector<64x4xf32>
    %c0_44 = arith.constant 0 : index
    %c28 = arith.constant 28 : index
    %31 = vector.load %arg5[%c0_44, %c28] : memref<128x64xf32, #tpu.memory_space<vmem>>, vector<64x4xf32>
    tpu.vector_store %arg5[%c0_44, %c28], %30 {strides = array<i32>} : memref<128x64xf32, #tpu.memory_space<vmem>>, vector<64x4xf32>,
    %c0_45 = arith.constant 0 : index
    %c0_46 = arith.constant 0 : index
    %c1_47 = arith.constant 1 : index
    %c0_48 = arith.constant 0 : index
    %c0_49 = arith.constant 0 : index
    %32 = vector.load %arg1[%c0_45, %c0_46, %c1_47, %c0_48, %c0_49] : memref<2x4x9x9x4xf32, #tpu.memory_space<vmem>>, vector<1x1x8x8x4xf32>
    %33 = vector.shape_cast %32 : vector<1x1x8x8x4xf32> to vector<8x8x4xf32>
    %34 = vector.shape_cast %33 : vector<8x8x4xf32> to vector<64x4xf32>
    %c0_50 = arith.constant 0 : index
    %c32 = arith.constant 32 : index
    %35 = vector.load %arg5[%c0_50, %c32] : memref<128x64xf32, #tpu.memory_space<vmem>>, vector<64x4xf32>
    tpu.vector_store %arg5[%c0_50, %c32], %34 {strides = array<i32>} : memref<128x64xf32, #tpu.memory_space<vmem>>, vector<64x4xf32>,
    %c0_51 = arith.constant 0 : index
    %c1_52 = arith.constant 1 : index
    %c1_53 = arith.constant 1 : index
    %c0_54 = arith.constant 0 : index
    %c0_55 = arith.constant 0 : index
    %36 = vector.load %arg1[%c0_51, %c1_52, %c1_53, %c0_54, %c0_55] : memref<2x4x9x9x4xf32, #tpu.memory_space<vmem>>, vector<1x1x8x8x4xf32>
    %37 = vector.shape_cast %36 : vector<1x1x8x8x4xf32> to vector<8x8x4xf32>
    %38 = vector.shape_cast %37 : vector<8x8x4xf32> to vector<64x4xf32>
    %c0_56 = arith.constant 0 : index
    %c36 = arith.constant 36 : index
    %39 = vector.load %arg5[%c0_56, %c36] : memref<128x64xf32, #tpu.memory_space<vmem>>, vector<64x4xf32>
    tpu.vector_store %arg5[%c0_56, %c36], %38 {strides = array<i32>} : memref<128x64xf32, #tpu.memory_space<vmem>>, vector<64x4xf32>,
    %c0_57 = arith.constant 0 : index
    %c0_58 = arith.constant 0 : index
    %c1_59 = arith.constant 1 : index
    %c1_60 = arith.constant 1 : index
    %c0_61 = arith.constant 0 : index
    %40 = vector.load %arg1[%c0_57, %c0_58, %c1_59, %c1_60, %c0_61] : memref<2x4x9x9x4xf32, #tpu.memory_space<vmem>>, vector<1x1x8x8x4xf32>
    %41 = vector.shape_cast %40 : vector<1x1x8x8x4xf32> to vector<8x8x4xf32>
    %42 = vector.shape_cast %41 : vector<8x8x4xf32> to vector<64x4xf32>
    %c0_62 = arith.constant 0 : index
    %c40 = arith.constant 40 : index
    %43 = vector.load %arg5[%c0_62, %c40] : memref<128x64xf32, #tpu.memory_space<vmem>>, vector<64x4xf32>
    tpu.vector_store %arg5[%c0_62, %c40], %42 {strides = array<i32>} : memref<128x64xf32, #tpu.memory_space<vmem>>, vector<64x4xf32>,
    %c0_63 = arith.constant 0 : index
    %c1_64 = arith.constant 1 : index
    %c1_65 = arith.constant 1 : index
    %c1_66 = arith.constant 1 : index
    %c0_67 = arith.constant 0 : index
    %44 = vector.load %arg1[%c0_63, %c1_64, %c1_65, %c1_66, %c0_67] : memref<2x4x9x9x4xf32, #tpu.memory_space<vmem>>, vector<1x1x8x8x4xf32>
    %45 = vector.shape_cast %44 : vector<1x1x8x8x4xf32> to vector<8x8x4xf32>
    %46 = vector.shape_cast %45 : vector<8x8x4xf32> to vector<64x4xf32>
    %c0_68 = arith.constant 0 : index
    %c44 = arith.constant 44 : index
    %47 = vector.load %arg5[%c0_68, %c44] : memref<128x64xf32, #tpu.memory_space<vmem>>, vector<64x4xf32>
    tpu.vector_store %arg5[%c0_68, %c44], %46 {strides = array<i32>} : memref<128x64xf32, #tpu.memory_space<vmem>>, vector<64x4xf32>,
    %c0_69 = arith.constant 0 : index
    %c2_70 = arith.constant 2 : index
    %c1_71 = arith.constant 1 : index
    %c0_72 = arith.constant 0 : index
    %c0_73 = arith.constant 0 : index
    %48 = vector.load %arg1[%c0_69, %c2_70, %c1_71, %c0_72, %c0_73] : memref<2x4x9x9x4xf32, #tpu.memory_space<vmem>>, vector<1x1x8x8x4xf32>
    %49 = vector.shape_cast %48 : vector<1x1x8x8x4xf32> to vector<8x8x4xf32>
    %50 = vector.shape_cast %49 : vector<8x8x4xf32> to vector<64x4xf32>
    %c0_74 = arith.constant 0 : index
    %c48 = arith.constant 48 : index
    %51 = vector.load %arg5[%c0_74, %c48] : memref<128x64xf32, #tpu.memory_space<vmem>>, vector<64x4xf32>
    tpu.vector_store %arg5[%c0_74, %c48], %50 {strides = array<i32>} : memref<128x64xf32, #tpu.memory_space<vmem>>, vector<64x4xf32>,
    %c0_75 = arith.constant 0 : index
    %c3_76 = arith.constant 3 : index
    %c1_77 = arith.constant 1 : index
    %c0_78 = arith.constant 0 : index
    %c0_79 = arith.constant 0 : index
    %52 = vector.load %arg1[%c0_75, %c3_76, %c1_77, %c0_78, %c0_79] : memref<2x4x9x9x4xf32, #tpu.memory_space<vmem>>, vector<1x1x8x8x4xf32>
    %53 = vector.shape_cast %52 : vector<1x1x8x8x4xf32> to vector<8x8x4xf32>
    %54 = vector.shape_cast %53 : vector<8x8x4xf32> to vector<64x4xf32>
    %c0_80 = arith.constant 0 : index
    %c52 = arith.constant 52 : index
    %55 = vector.load %arg5[%c0_80, %c52] : memref<128x64xf32, #tpu.memory_space<vmem>>, vector<64x4xf32>
    tpu.vector_store %arg5[%c0_80, %c52], %54 {strides = array<i32>} : memref<128x64xf32, #tpu.memory_space<vmem>>, vector<64x4xf32>,
    %c0_81 = arith.constant 0 : index
    %c2_82 = arith.constant 2 : index
    %c1_83 = arith.constant 1 : index
    %c1_84 = arith.constant 1 : index
    %c0_85 = arith.constant 0 : index
    %56 = vector.load %arg1[%c0_81, %c2_82, %c1_83, %c1_84, %c0_85] : memref<2x4x9x9x4xf32, #tpu.memory_space<vmem>>, vector<1x1x8x8x4xf32>
    %57 = vector.shape_cast %56 : vector<1x1x8x8x4xf32> to vector<8x8x4xf32>
    %58 = vector.shape_cast %57 : vector<8x8x4xf32> to vector<64x4xf32>
    %c0_86 = arith.constant 0 : index
    %c56 = arith.constant 56 : index
    %59 = vector.load %arg5[%c0_86, %c56] : memref<128x64xf32, #tpu.memory_space<vmem>>, vector<64x4xf32>
    tpu.vector_store %arg5[%c0_86, %c56], %58 {strides = array<i32>} : memref<128x64xf32, #tpu.memory_space<vmem>>, vector<64x4xf32>,
    %c0_87 = arith.constant 0 : index
    %c3_88 = arith.constant 3 : index
    %c1_89 = arith.constant 1 : index
    %c1_90 = arith.constant 1 : index
    %c0_91 = arith.constant 0 : index
    %60 = vector.load %arg1[%c0_87, %c3_88, %c1_89, %c1_90, %c0_91] : memref<2x4x9x9x4xf32, #tpu.memory_space<vmem>>, vector<1x1x8x8x4xf32>
    %61 = vector.shape_cast %60 : vector<1x1x8x8x4xf32> to vector<8x8x4xf32>
    %62 = vector.shape_cast %61 : vector<8x8x4xf32> to vector<64x4xf32>
    %c0_92 = arith.constant 0 : index
    %c60 = arith.constant 60 : index
    %63 = vector.load %arg5[%c0_92, %c60] : memref<128x64xf32, #tpu.memory_space<vmem>>, vector<64x4xf32>
    tpu.vector_store %arg5[%c0_92, %c60], %62 {strides = array<i32>} : memref<128x64xf32, #tpu.memory_space<vmem>>, vector<64x4xf32>,
    %c1_93 = arith.constant 1 : index
    %c0_94 = arith.constant 0 : index
    %c0_95 = arith.constant 0 : index
    %c0_96 = arith.constant 0 : index
    %c0_97 = arith.constant 0 : index
    %64 = vector.load %arg1[%c1_93, %c0_94, %c0_95, %c0_96, %c0_97] : memref<2x4x9x9x4xf32, #tpu.memory_space<vmem>>, vector<1x1x8x8x4xf32>
    %65 = vector.shape_cast %64 : vector<1x1x8x8x4xf32> to vector<8x8x4xf32>
    %66 = vector.shape_cast %65 : vector<8x8x4xf32> to vector<64x4xf32>
    %c64 = arith.constant 64 : index
    %c0_98 = arith.constant 0 : index
    %67 = vector.load %arg5[%c64, %c0_98] : memref<128x64xf32, #tpu.memory_space<vmem>>, vector<64x4xf32>
    tpu.vector_store %arg5[%c64, %c0_98], %66 {strides = array<i32>} : memref<128x64xf32, #tpu.memory_space<vmem>>, vector<64x4xf32>,
    %c1_99 = arith.constant 1 : index
    %c1_100 = arith.constant 1 : index
    %c0_101 = arith.constant 0 : index
    %c0_102 = arith.constant 0 : index
    %c0_103 = arith.constant 0 : index
    %68 = vector.load %arg1[%c1_99, %c1_100, %c0_101, %c0_102, %c0_103] : memref<2x4x9x9x4xf32, #tpu.memory_space<vmem>>, vector<1x1x8x8x4xf32>
    %69 = vector.shape_cast %68 : vector<1x1x8x8x4xf32> to vector<8x8x4xf32>
    %70 = vector.shape_cast %69 : vector<8x8x4xf32> to vector<64x4xf32>
    %c64_104 = arith.constant 64 : index
    %c4_105 = arith.constant 4 : index
    %71 = vector.load %arg5[%c64_104, %c4_105] : memref<128x64xf32, #tpu.memory_space<vmem>>, vector<64x4xf32>
    tpu.vector_store %arg5[%c64_104, %c4_105], %70 {strides = array<i32>} : memref<128x64xf32, #tpu.memory_space<vmem>>, vector<64x4xf32>,
    %c1_106 = arith.constant 1 : index
    %c0_107 = arith.constant 0 : index
    %c0_108 = arith.constant 0 : index
    %c1_109 = arith.constant 1 : index
    %c0_110 = arith.constant 0 : index
    %72 = vector.load %arg1[%c1_106, %c0_107, %c0_108, %c1_109, %c0_110] : memref<2x4x9x9x4xf32, #tpu.memory_space<vmem>>, vector<1x1x8x8x4xf32>
    %73 = vector.shape_cast %72 : vector<1x1x8x8x4xf32> to vector<8x8x4xf32>
    %74 = vector.shape_cast %73 : vector<8x8x4xf32> to vector<64x4xf32>
    %c64_111 = arith.constant 64 : index
    %c8_112 = arith.constant 8 : index
    %75 = vector.load %arg5[%c64_111, %c8_112] : memref<128x64xf32, #tpu.memory_space<vmem>>, vector<64x4xf32>
    tpu.vector_store %arg5[%c64_111, %c8_112], %74 {strides = array<i32>} : memref<128x64xf32, #tpu.memory_space<vmem>>, vector<64x4xf32>,
    %c1_113 = arith.constant 1 : index
    %c1_114 = arith.constant 1 : index
    %c0_115 = arith.constant 0 : index
    %c1_116 = arith.constant 1 : index
    %c0_117 = arith.constant 0 : index
    %76 = vector.load %arg1[%c1_113, %c1_114, %c0_115, %c1_116, %c0_117] : memref<2x4x9x9x4xf32, #tpu.memory_space<vmem>>, vector<1x1x8x8x4xf32>
    %77 = vector.shape_cast %76 : vector<1x1x8x8x4xf32> to vector<8x8x4xf32>
    %78 = vector.shape_cast %77 : vector<8x8x4xf32> to vector<64x4xf32>
    %c64_118 = arith.constant 64 : index
    %c12_119 = arith.constant 12 : index
    %79 = vector.load %arg5[%c64_118, %c12_119] : memref<128x64xf32, #tpu.memory_space<vmem>>, vector<64x4xf32>
    tpu.vector_store %arg5[%c64_118, %c12_119], %78 {strides = array<i32>} : memref<128x64xf32, #tpu.memory_space<vmem>>, vector<64x4xf32>,
    %c1_120 = arith.constant 1 : index
    %c2_121 = arith.constant 2 : index
    %c0_122 = arith.constant 0 : index
    %c0_123 = arith.constant 0 : index
    %c0_124 = arith.constant 0 : index
    %80 = vector.load %arg1[%c1_120, %c2_121, %c0_122, %c0_123, %c0_124] : memref<2x4x9x9x4xf32, #tpu.memory_space<vmem>>, vector<1x1x8x8x4xf32>
    %81 = vector.shape_cast %80 : vector<1x1x8x8x4xf32> to vector<8x8x4xf32>
    %82 = vector.shape_cast %81 : vector<8x8x4xf32> to vector<64x4xf32>
    %c64_125 = arith.constant 64 : index
    %c16_126 = arith.constant 16 : index
    %83 = vector.load %arg5[%c64_125, %c16_126] : memref<128x64xf32, #tpu.memory_space<vmem>>, vector<64x4xf32>
    tpu.vector_store %arg5[%c64_125, %c16_126], %82 {strides = array<i32>} : memref<128x64xf32, #tpu.memory_space<vmem>>, vector<64x4xf32>,
    %c1_127 = arith.constant 1 : index
    %c3_128 = arith.constant 3 : index
    %c0_129 = arith.constant 0 : index
    %c0_130 = arith.constant 0 : index
    %c0_131 = arith.constant 0 : index
    %84 = vector.load %arg1[%c1_127, %c3_128, %c0_129, %c0_130, %c0_131] : memref<2x4x9x9x4xf32, #tpu.memory_space<vmem>>, vector<1x1x8x8x4xf32>
    %85 = vector.shape_cast %84 : vector<1x1x8x8x4xf32> to vector<8x8x4xf32>
    %86 = vector.shape_cast %85 : vector<8x8x4xf32> to vector<64x4xf32>
    %c64_132 = arith.constant 64 : index
    %c20_133 = arith.constant 20 : index
    %87 = vector.load %arg5[%c64_132, %c20_133] : memref<128x64xf32, #tpu.memory_space<vmem>>, vector<64x4xf32>
    tpu.vector_store %arg5[%c64_132, %c20_133], %86 {strides = array<i32>} : memref<128x64xf32, #tpu.memory_space<vmem>>, vector<64x4xf32>,
    %c1_134 = arith.constant 1 : index
    %c2_135 = arith.constant 2 : index
    %c0_136 = arith.constant 0 : index
    %c1_137 = arith.constant 1 : index
    %c0_138 = arith.constant 0 : index
    %88 = vector.load %arg1[%c1_134, %c2_135, %c0_136, %c1_137, %c0_138] : memref<2x4x9x9x4xf32, #tpu.memory_space<vmem>>, vector<1x1x8x8x4xf32>
    %89 = vector.shape_cast %88 : vector<1x1x8x8x4xf32> to vector<8x8x4xf32>
    %90 = vector.shape_cast %89 : vector<8x8x4xf32> to vector<64x4xf32>
    %c64_139 = arith.constant 64 : index
    %c24_140 = arith.constant 24 : index
    %91 = vector.load %arg5[%c64_139, %c24_140] : memref<128x64xf32, #tpu.memory_space<vmem>>, vector<64x4xf32>
    tpu.vector_store %arg5[%c64_139, %c24_140], %90 {strides = array<i32>} : memref<128x64xf32, #tpu.memory_space<vmem>>, vector<64x4xf32>,
    %c1_141 = arith.constant 1 : index
    %c3_142 = arith.constant 3 : index
    %c0_143 = arith.constant 0 : index
    %c1_144 = arith.constant 1 : index
    %c0_145 = arith.constant 0 : index
    %92 = vector.load %arg1[%c1_141, %c3_142, %c0_143, %c1_144, %c0_145] : memref<2x4x9x9x4xf32, #tpu.memory_space<vmem>>, vector<1x1x8x8x4xf32>
    %93 = vector.shape_cast %92 : vector<1x1x8x8x4xf32> to vector<8x8x4xf32>
    %94 = vector.shape_cast %93 : vector<8x8x4xf32> to vector<64x4xf32>
    %c64_146 = arith.constant 64 : index
    %c28_147 = arith.constant 28 : index
    %95 = vector.load %arg5[%c64_146, %c28_147] : memref<128x64xf32, #tpu.memory_space<vmem>>, vector<64x4xf32>
    tpu.vector_store %arg5[%c64_146, %c28_147], %94 {strides = array<i32>} : memref<128x64xf32, #tpu.memory_space<vmem>>, vector<64x4xf32>,
    %c1_148 = arith.constant 1 : index
    %c0_149 = arith.constant 0 : index
    %c1_150 = arith.constant 1 : index
    %c0_151 = arith.constant 0 : index
    %c0_152 = arith.constant 0 : index
    %96 = vector.load %arg1[%c1_148, %c0_149, %c1_150, %c0_151, %c0_152] : memref<2x4x9x9x4xf32, #tpu.memory_space<vmem>>, vector<1x1x8x8x4xf32>
    %97 = vector.shape_cast %96 : vector<1x1x8x8x4xf32> to vector<8x8x4xf32>
    %98 = vector.shape_cast %97 : vector<8x8x4xf32> to vector<64x4xf32>
    %c64_153 = arith.constant 64 : index
    %c32_154 = arith.constant 32 : index
    %99 = vector.load %arg5[%c64_153, %c32_154] : memref<128x64xf32, #tpu.memory_space<vmem>>, vector<64x4xf32>
    tpu.vector_store %arg5[%c64_153, %c32_154], %98 {strides = array<i32>} : memref<128x64xf32, #tpu.memory_space<vmem>>, vector<64x4xf32>,
    %c1_155 = arith.constant 1 : index
    %c1_156 = arith.constant 1 : index
    %c1_157 = arith.constant 1 : index
    %c0_158 = arith.constant 0 : index
    %c0_159 = arith.constant 0 : index
    %100 = vector.load %arg1[%c1_155, %c1_156, %c1_157, %c0_158, %c0_159] : memref<2x4x9x9x4xf32, #tpu.memory_space<vmem>>, vector<1x1x8x8x4xf32>
    %101 = vector.shape_cast %100 : vector<1x1x8x8x4xf32> to vector<8x8x4xf32>
    %102 = vector.shape_cast %101 : vector<8x8x4xf32> to vector<64x4xf32>
    %c64_160 = arith.constant 64 : index
    %c36_161 = arith.constant 36 : index
    %103 = vector.load %arg5[%c64_160, %c36_161] : memref<128x64xf32, #tpu.memory_space<vmem>>, vector<64x4xf32>
    tpu.vector_store %arg5[%c64_160, %c36_161], %102 {strides = array<i32>} : memref<128x64xf32, #tpu.memory_space<vmem>>, vector<64x4xf32>,
    %c1_162 = arith.constant 1 : index
    %c0_163 = arith.constant 0 : index
    %c1_164 = arith.constant 1 : index
    %c1_165 = arith.constant 1 : index
    %c0_166 = arith.constant 0 : index
    %104 = vector.load %arg1[%c1_162, %c0_163, %c1_164, %c1_165, %c0_166] : memref<2x4x9x9x4xf32, #tpu.memory_space<vmem>>, vector<1x1x8x8x4xf32>
    %105 = vector.shape_cast %104 : vector<1x1x8x8x4xf32> to vector<8x8x4xf32>
    %106 = vector.shape_cast %105 : vector<8x8x4xf32> to vector<64x4xf32>
    %c64_167 = arith.constant 64 : index
    %c40_168 = arith.constant 40 : index
    %107 = vector.load %arg5[%c64_167, %c40_168] : memref<128x64xf32, #tpu.memory_space<vmem>>, vector<64x4xf32>
    tpu.vector_store %arg5[%c64_167, %c40_168], %106 {strides = array<i32>} : memref<128x64xf32, #tpu.memory_space<vmem>>, vector<64x4xf32>,
    %c1_169 = arith.constant 1 : index
    %c1_170 = arith.constant 1 : index
    %c1_171 = arith.constant 1 : index
    %c1_172 = arith.constant 1 : index
    %c0_173 = arith.constant 0 : index
    %108 = vector.load %arg1[%c1_169, %c1_170, %c1_171, %c1_172, %c0_173] : memref<2x4x9x9x4xf32, #tpu.memory_space<vmem>>, vector<1x1x8x8x4xf32>
    %109 = vector.shape_cast %108 : vector<1x1x8x8x4xf32> to vector<8x8x4xf32>
    %110 = vector.shape_cast %109 : vector<8x8x4xf32> to vector<64x4xf32>
    %c64_174 = arith.constant 64 : index
    %c44_175 = arith.constant 44 : index
    %111 = vector.load %arg5[%c64_174, %c44_175] : memref<128x64xf32, #tpu.memory_space<vmem>>, vector<64x4xf32>
    tpu.vector_store %arg5[%c64_174, %c44_175], %110 {strides = array<i32>} : memref<128x64xf32, #tpu.memory_space<vmem>>, vector<64x4xf32>,
    %c1_176 = arith.constant 1 : index
    %c2_177 = arith.constant 2 : index
    %c1_178 = arith.constant 1 : index
    %c0_179 = arith.constant 0 : index
    %c0_180 = arith.constant 0 : index
    %112 = vector.load %arg1[%c1_176, %c2_177, %c1_178, %c0_179, %c0_180] : memref<2x4x9x9x4xf32, #tpu.memory_space<vmem>>, vector<1x1x8x8x4xf32>
    %113 = vector.shape_cast %112 : vector<1x1x8x8x4xf32> to vector<8x8x4xf32>
    %114 = vector.shape_cast %113 : vector<8x8x4xf32> to vector<64x4xf32>
    %c64_181 = arith.constant 64 : index
    %c48_182 = arith.constant 48 : index
    %115 = vector.load %arg5[%c64_181, %c48_182] : memref<128x64xf32, #tpu.memory_space<vmem>>, vector<64x4xf32>
    tpu.vector_store %arg5[%c64_181, %c48_182], %114 {strides = array<i32>} : memref<128x64xf32, #tpu.memory_space<vmem>>, vector<64x4xf32>,
    %c1_183 = arith.constant 1 : index
    %c3_184 = arith.constant 3 : index
    %c1_185 = arith.constant 1 : index
    %c0_186 = arith.constant 0 : index
    %c0_187 = arith.constant 0 : index
    %116 = vector.load %arg1[%c1_183, %c3_184, %c1_185, %c0_186, %c0_187] : memref<2x4x9x9x4xf32, #tpu.memory_space<vmem>>, vector<1x1x8x8x4xf32>
    %117 = vector.shape_cast %116 : vector<1x1x8x8x4xf32> to vector<8x8x4xf32>
    %118 = vector.shape_cast %117 : vector<8x8x4xf32> to vector<64x4xf32>
    %c64_188 = arith.constant 64 : index
    %c52_189 = arith.constant 52 : index
    %119 = vector.load %arg5[%c64_188, %c52_189] : memref<128x64xf32, #tpu.memory_space<vmem>>, vector<64x4xf32>
    tpu.vector_store %arg5[%c64_188, %c52_189], %118 {strides = array<i32>} : memref<128x64xf32, #tpu.memory_space<vmem>>, vector<64x4xf32>,
    %c1_190 = arith.constant 1 : index
    %c2_191 = arith.constant 2 : index
    %c1_192 = arith.constant 1 : index
    %c1_193 = arith.constant 1 : index
    %c0_194 = arith.constant 0 : index
    %120 = vector.load %arg1[%c1_190, %c2_191, %c1_192, %c1_193, %c0_194] : memref<2x4x9x9x4xf32, #tpu.memory_space<vmem>>, vector<1x1x8x8x4xf32>
    %121 = vector.shape_cast %120 : vector<1x1x8x8x4xf32> to vector<8x8x4xf32>
    %122 = vector.shape_cast %121 : vector<8x8x4xf32> to vector<64x4xf32>
    %c64_195 = arith.constant 64 : index
    %c56_196 = arith.constant 56 : index
    %123 = vector.load %arg5[%c64_195, %c56_196] : memref<128x64xf32, #tpu.memory_space<vmem>>, vector<64x4xf32>
    tpu.vector_store %arg5[%c64_195, %c56_196], %122 {strides = array<i32>} : memref<128x64xf32, #tpu.memory_space<vmem>>, vector<64x4xf32>,
    %c1_197 = arith.constant 1 : index
    %c3_198 = arith.constant 3 : index
    %c1_199 = arith.constant 1 : index
    %c1_200 = arith.constant 1 : index
    %c0_201 = arith.constant 0 : index
    %124 = vector.load %arg1[%c1_197, %c3_198, %c1_199, %c1_200, %c0_201] : memref<2x4x9x9x4xf32, #tpu.memory_space<vmem>>, vector<1x1x8x8x4xf32>
    %125 = vector.shape_cast %124 : vector<1x1x8x8x4xf32> to vector<8x8x4xf32>
    %126 = vector.shape_cast %125 : vector<8x8x4xf32> to vector<64x4xf32>
    %c64_202 = arith.constant 64 : index
    %c60_203 = arith.constant 60 : index
    %127 = vector.load %arg5[%c64_202, %c60_203] : memref<128x64xf32, #tpu.memory_space<vmem>>, vector<64x4xf32>
    tpu.vector_store %arg5[%c64_202, %c60_203], %126 {strides = array<i32>} : memref<128x64xf32, #tpu.memory_space<vmem>>, vector<64x4xf32>,
    %c0_204 = arith.constant 0 : index
    %c0_205 = arith.constant 0 : index
    %128 = vector.load %arg2[%c0_204, %c0_205] : memref<8x64xf32, #tpu.memory_space<vmem>>, vector<8x64xf32>
    %c0_206 = arith.constant 0 : index
    %c0_207 = arith.constant 0 : index
    %129 = vector.load %arg5[%c0_206, %c0_207] : memref<128x64xf32, #tpu.memory_space<vmem>>, vector<128x64xf32>
    %cst = arith.constant dense<0.000000e+00> : vector<8x128xf32>
    %130 = tpu.matmul %128, %129, %cst {dimension_numbers = #tpu.dot_dimension_numbers<[1], [1], [0], [0], [0, 0, 1, 0], [], []>} : vector<8x64xf32>, vector<128x64xf32>, vector<8x128xf32> -> vector<8x128xf32>
    %c0_208 = arith.constant 0 : index
    %c0_209 = arith.constant 0 : index
    %131 = vector.load %arg3[%c0_208, %c0_209] : memref<8x1xf32, #tpu.memory_space<vmem>>, vector<8x1xf32>
    %132 = vector.broadcast %131 : vector<8x1xf32> to vector<8x128xf32>
    %133 = arith.addf %130, %132 : vector<8x128xf32>
    %c0_210 = arith.constant 0 : index
    %c0_211 = arith.constant 0 : index
    %c0_212 = arith.constant 0 : index
    %134 = vector.load %arg4[%c0_210, %c0_211, %c0_212] : memref<1x8x128xf32, #tpu.memory_space<vmem>>, vector<1x8x128xf32>
    %135 = vector.shape_cast %134 : vector<1x8x128xf32> to vector<8x128xf32>
    %136 = vector.shape_cast %133 : vector<8x128xf32> to vector<1x8x128xf32>
    tpu.vector_store %arg4[%c0_210, %c0_211, %c0_212], %136 {strides = array<i32>} : memref<1x8x128xf32, #tpu.memory_space<vmem>>, vector<1x8x128xf32>,
    return
  }
  func.func @transform_0(%arg0: i32) -> (i32, i32, i32, i32, i32) {
    %c0_i32 = arith.constant 0 : i32
    %c0_i32_0 = arith.constant 0 : i32
    %c0_i32_1 = arith.constant 0 : i32
    %c0_i32_2 = arith.constant 0 : i32
    %c0_i32_3 = arith.constant 0 : i32
    return %arg0, %c0_i32, %c0_i32_0, %c0_i32_1, %c0_i32_2 : i32, i32, i32, i32, i32
  }
  func.func @transform_1(%arg0: i32) -> (i32, i32) {
    %c0_i32 = arith.constant 0 : i32
    %c0_i32_0 = arith.constant 0 : i32
    %c0_i32_1 = arith.constant 0 : i32
    return %c0_i32, %c0_i32_0 : i32, i32
  }
  func.func @transform_2(%arg0: i32) -> (i32, i32) {
    %c0_i32 = arith.constant 0 : i32
    %c0_i32_0 = arith.constant 0 : i32
    %c0_i32_1 = arith.constant 0 : i32
    return %c0_i32, %c0_i32_0 : i32, i32
  }
  func.func @transform_3(%arg0: i32) -> (i32, i32, i32) {
    %c0_i32 = arith.constant 0 : i32
    %c0_i32_0 = arith.constant 0 : i32
    %c0_i32_1 = arith.constant 0 : i32
    return %arg0, %c0_i32, %c0_i32_0 : i32, i32, i32
  }
}

</mosaic_0001>

<llo_original>
// kernel: tpu_custom_call.1
$region0: #{tpu_custom_call.1}
  #allocation0 [shape = 'u32[]', space=smem, size = 0x4, offset = 0x4, fixed_abs, tag = 'smem constant byte address 0x4 - core index']
  #allocation1 [shape = 'u32[144,128]{1,0:T(1,128)}', space=vmem, size = 0x12000, scoped, tag = 'internal scratch']
  #allocation2 [shape = 'f32[128,64]{1,0:T(8,128)}', space=vmem, size = 0x10000, scoped, tag = 'scratch operand']
  %s0 = inlined_call_operand.vmem [shape: f32[2,4,9,9,4], index: 0, kind: input, shape index: {}]
  %s1 = inlined_call_operand.vmem [shape: f32[8,64], index: 1, kind: input, shape index: {}]
  %s2 = inlined_call_operand.vmem [shape: f32[8,1], index: 2, kind: input, shape index: {}]
  %s3 = inlined_call_operand.hbm [shape: f32[1,8,128], index: 3, kind: output, shape index: {}]
  %s4 = sld [smem:[#allocation0]]
  $region22: #{tpu_custom_call.1} parent=0
    _
  %s6 = ssub.s32 1, %s4
  %s7 = scalar_select 0, %s6, %s4
  $region1: #{tpu_custom_call.1} parent=0
    #allocation3 [shape = 'u8[4096]{0}', space=vmem, size = 0x1000, scoped, tag = 'output window, operand 0, single buffered']
    #allocation4 [shape = 's32[1]{0}', space=sflag, size = 0x4, scoped, tag = 'scoped memory for tpu_custom_call.1']
    %8 = vsyncpa [#allocation4], 0
    // Predicated region
    $region2: #{tpu_custom_call.1} parent=1 // pred_check
      _
    $region3: #{tpu_custom_call.1} parent=1 // pred_check_branch
      %10 = sbr.rel (0) target = $region5
    $region4: #{tpu_custom_call.1} parent=1 // pred_region
      _
    $region5: #{tpu_custom_call.1} parent=1 // pred_fallthru
      _
    // Predicated region
    $region6: #{tpu_custom_call.1} parent=1 // pred_check
      _
    $region7: #{tpu_custom_call.1} parent=1 // pred_check_branch
      %12 = sbr.rel (0) target = $region9
    $region8: #{tpu_custom_call.1} parent=1 // pred_region
      _
    $region9: #{tpu_custom_call.1} parent=1 // pred_fallthru
      _
    // Predicated region
    $region10: #{tpu_custom_call.1} parent=1 // pred_check
      _
    $region11: #{tpu_custom_call.1} parent=1 // pred_check_branch
      %14 = sbr.rel (0) target = $region13
    $region12: #{tpu_custom_call.1} parent=1 // pred_region
      _
    $region13: #{tpu_custom_call.1} parent=1 // pred_fallthru
      _
    %v15 = vld [vmem:[%s0] sm:$0xff]
    %v16 = vld [vmem:[%s0 + $0x10] sm:$0xff]
    %v17 = vld [vmem:[%s0 + $0x20] sm:$0xff]
    %v18 = vld [vmem:[%s0 + $0x30] sm:$0xff]
    %v19 = vld [vmem:[%s0 + $0x40] sm:$0xff]
    %v20 = vld [vmem:[%s0 + $0x50] sm:$0xff]
    %v21 = vld [vmem:[%s0 + $0x60] sm:$0xff]
    %v22 = vld [vmem:[%s0 + $0x70] sm:$0xff]
    %vm23 = vcmask 31744
    %24 = vst.msk [vmem:[#allocation2] sm:$0xff] %vm23, %v15
    %25 = vst.msk [vmem:[#allocation2 + $0x8] sm:$0xff] %vm23, %v16
    %26 = vst.msk [vmem:[#allocation2 + $0x10] sm:$0xff] %vm23, %v17
    %27 = vst.msk [vmem:[#allocation2 + $0x18] sm:$0xff] %vm23, %v18
    %28 = vst.msk [vmem:[#allocation2 + $0x20] sm:$0xff] %vm23, %v19
    %29 = vst.msk [vmem:[#allocation2 + $0x28] sm:$0xff] %vm23, %v20
    %30 = vst.msk [vmem:[#allocation2 + $0x30] sm:$0xff] %vm23, %v21
    %31 = vst.msk [vmem:[#allocation2 + $0x38] sm:$0xff] %vm23, %v22
    %s32 = scalar_lea.vmem %s0, 144
    %v33 = vld [vmem:[%s32] sm:$0xff]
    %v34 = vld [vmem:[%s32 + $0x10] sm:$0xff]
    %v35 = vld [vmem:[%s32 + $0x20] sm:$0xff]
    %v36 = vld [vmem:[%s32 + $0x30] sm:$0xff]
    %v37 = vld [vmem:[%s32 + $0x40] sm:$0xff]
    %v38 = vld [vmem:[%s32 + $0x50] sm:$0xff]
    %v39 = vld [vmem:[%s32 + $0x60] sm:$0xff]
    %v40 = vld [vmem:[%s32 + $0x70] sm:$0xff]
    %49 = vrot.lane.b32.xlu0 %v33, 4
    %v50 = vpop.permute.xlu0 %49
    %51 = vrot.lane.b32.xlu0 %v34, 4
    %v52 = vpop.permute.xlu0 %51
    %53 = vrot.lane.b32.xlu0 %v35, 4
    %v54 = vpop.permute.xlu0 %53
    %55 = vrot.lane.b32.xlu0 %v36, 4
    %v56 = vpop.permute.xlu0 %55
    %57 = vrot.lane.b32.xlu0 %v37, 4
    %v58 = vpop.permute.xlu0 %57
    %59 = vrot.lane.b32.xlu0 %v38, 4
    %v60 = vpop.permute.xlu0 %59
    %61 = vrot.lane.b32.xlu0 %v39, 4
    %v62 = vpop.permute.xlu0 %61
    %63 = vrot.lane.b32.xlu0 %v40, 4
    %v64 = vpop.permute.xlu0 %63
    %vm73 = vcmask 64544
    %74 = vst.msk [vmem:[#allocation2] sm:$0xff] %vm73, %v50
    %75 = vst.msk [vmem:[#allocation2 + $0x8] sm:$0xff] %vm73, %v52
    %76 = vst.msk [vmem:[#allocation2 + $0x10] sm:$0xff] %vm73, %v54
    %77 = vst.msk [vmem:[#allocation2 + $0x18] sm:$0xff] %vm73, %v56
    %78 = vst.msk [vmem:[#allocation2 + $0x20] sm:$0xff] %vm73, %v58
    %79 = vst.msk [vmem:[#allocation2 + $0x28] sm:$0xff] %vm73, %v60
    %80 = vst.msk [vmem:[#allocation2 + $0x30] sm:$0xff] %vm73, %v62
    %81 = vst.msk [vmem:[#allocation2 + $0x38] sm:$0xff] %vm73, %v64
    %v82 = vld [vmem:[%s0 + $0x1] sm:$0xff]
    %v83 = vld [vmem:[%s0 + $0x11] sm:$0xff]
    %v84 = vld [vmem:[%s0 + $0x21] sm:$0xff]
    %v85 = vld [vmem:[%s0 + $0x31] sm:$0xff]
    %v86 = vld [vmem:[%s0 + $0x41] sm:$0xff]
    %v87 = vld [vmem:[%s0 + $0x51] sm:$0xff]
    %v88 = vld [vmem:[%s0 + $0x61] sm:$0xff]
    %v89 = vld [vmem:[%s0 + $0x71] sm:$0xff]
    %98 = vrot.lane.b32.xlu0 %v82, 8
    %v99 = vpop.permute.xlu0 %98
    %100 = vrot.lane.b32.xlu0 %v83, 8
    %v101 = vpop.permute.xlu0 %100
    %102 = vrot.lane.b32.xlu0 %v84, 8
    %v103 = vpop.permute.xlu0 %102
    %104 = vrot.lane.b32.xlu0 %v85, 8
    %v105 = vpop.permute.xlu0 %104
    %106 = vrot.lane.b32.xlu0 %v86, 8
    %v107 = vpop.permute.xlu0 %106
    %108 = vrot.lane.b32.xlu0 %v87, 8
    %v109 = vpop.permute.xlu0 %108
    %110 = vrot.lane.b32.xlu0 %v88, 8
    %v111 = vpop.permute.xlu0 %110
    %112 = vrot.lane.b32.xlu0 %v89, 8
    %v113 = vpop.permute.xlu0 %112
    %vm122 = vcmask 97344
    %123 = vst.msk [vmem:[#allocation2] sm:$0xff] %vm122, %v99
    %124 = vst.msk [vmem:[#allocation2 + $0x8] sm:$0xff] %vm122, %v101
    %125 = vst.msk [vmem:[#allocation2 + $0x10] sm:$0xff] %vm122, %v103
    %126 = vst.msk [vmem:[#allocation2 + $0x18] sm:$0xff] %vm122, %v105
    %127 = vst.msk [vmem:[#allocation2 + $0x20] sm:$0xff] %vm122, %v107
    %128 = vst.msk [vmem:[#allocation2 + $0x28] sm:$0xff] %vm122, %v109
    %129 = vst.msk [vmem:[#allocation2 + $0x30] sm:$0xff] %vm122, %v111
    %130 = vst.msk [vmem:[#allocation2 + $0x38] sm:$0xff] %vm122, %v113
    %v131 = vld [vmem:[%s32 + $0x1] sm:$0xff]
    %v132 = vld [vmem:[%s32 + $0x11] sm:$0xff]
    %v133 = vld [vmem:[%s32 + $0x21] sm:$0xff]
    %v134 = vld [vmem:[%s32 + $0x31] sm:$0xff]
    %v135 = vld [vmem:[%s32 + $0x41] sm:$0xff]
    %v136 = vld [vmem:[%s32 + $0x51] sm:$0xff]
    %v137 = vld [vmem:[%s32 + $0x61] sm:$0xff]
    %v138 = vld [vmem:[%s32 + $0x71] sm:$0xff]
    %147 = vrot.lane.b32.xlu0 %v131, 12
    %v148 = vpop.permute.xlu0 %147
    %149 = vrot.lane.b32.xlu0 %v132, 12
    %v150 = vpop.permute.xlu0 %149
    %151 = vrot.lane.b32.xlu0 %v133, 12
    %v152 = vpop.permute.xlu0 %151
    %153 = vrot.lane.b32.xlu0 %v134, 12
    %v154 = vpop.permute.xlu0 %153
    %155 = vrot.lane.b32.xlu0 %v135, 12
    %v156 = vpop.permute.xlu0 %155
    %157 = vrot.lane.b32.xlu0 %v136, 12
    %v158 = vpop.permute.xlu0 %157
    %159 = vrot.lane.b32.xlu0 %v137, 12
    %v160 = vpop.permute.xlu0 %159
    %161 = vrot.lane.b32.xlu0 %v138, 12
    %v162 = vpop.permute.xlu0 %161
    %vm171 = vcmask 130144
    %172 = vst.msk [vmem:[#allocation2] sm:$0xff] %vm171, %v148
    %173 = vst.msk [vmem:[#allocation2 + $0x8] sm:$0xff] %vm171, %v150
    %174 = vst.msk [vmem:[#allocation2 + $0x10] sm:$0xff] %vm171, %v152
    %175 = vst.msk [vmem:[#allocation2 + $0x18] sm:$0xff] %vm171, %v154
    %176 = vst.msk [vmem:[#allocation2 + $0x20] sm:$0xff] %vm171, %v156
    %177 = vst.msk [vmem:[#allocation2 + $0x28] sm:$0xff] %vm171, %v158
    %178 = vst.msk [vmem:[#allocation2 + $0x30] sm:$0xff] %vm171, %v160
    %179 = vst.msk [vmem:[#allocation2 + $0x38] sm:$0xff] %vm171, %v162
    %s180 = scalar_lea.vmem %s0, 288
    %v181 = vld [vmem:[%s180] sm:$0xff]
    %v182 = vld [vmem:[%s180 + $0x10] sm:$0xff]
    %v183 = vld [vmem:[%s180 + $0x20] sm:$0xff]
    %v184 = vld [vmem:[%s180 + $0x30] sm:$0xff]
    %v185 = vld [vmem:[%s180 + $0x40] sm:$0xff]
    %v186 = vld [vmem:[%s180 + $0x50] sm:$0xff]
    %v187 = vld [vmem:[%s180 + $0x60] sm:$0xff]
    %v188 = vld [vmem:[%s180 + $0x70] sm:$0xff]
    %197 = vrot.lane.b32.xlu0 %v181, 16
    %v198 = vpop.permute.xlu0 %197
    %199 = vrot.lane.b32.xlu0 %v182, 16
    %v200 = vpop.permute.xlu0 %199
    %201 = vrot.lane.b32.xlu0 %v183, 16
    %v202 = vpop.permute.xlu0 %201
    %203 = vrot.lane.b32.xlu0 %v184, 16
    %v204 = vpop.permute.xlu0 %203
    %205 = vrot.lane.b32.xlu0 %v185, 16
    %v206 = vpop.permute.xlu0 %205
    %207 = vrot.lane.b32.xlu0 %v186, 16
    %v208 = vpop.permute.xlu0 %207
    %209 = vrot.lane.b32.xlu0 %v187, 16
    %v210 = vpop.permute.xlu0 %209
    %211 = vrot.lane.b32.xlu0 %v188, 16
    %v212 = vpop.permute.xlu0 %211
    %vm221 = vcmask 162944
    %222 = vst.msk [vmem:[#allocation2] sm:$0xff] %vm221, %v198
    %223 = vst.msk [vmem:[#allocation2 + $0x8] sm:$0xff] %vm221, %v200
    %224 = vst.msk [vmem:[#allocation2 + $0x10] sm:$0xff] %vm221, %v202
    %225 = vst.msk [vmem:[#allocation2 + $0x18] sm:$0xff] %vm221, %v204
    %226 = vst.msk [vmem:[#allocation2 + $0x20] sm:$0xff] %vm221, %v206
    %227 = vst.msk [vmem:[#allocation2 + $0x28] sm:$0xff] %vm221, %v208
    %228 = vst.msk [vmem:[#allocation2 + $0x30] sm:$0xff] %vm221, %v210
    %229 = vst.msk [vmem:[#allocation2 + $0x38] sm:$0xff] %vm221, %v212
    %s230 = scalar_lea.vmem %s0, 432
    %v231 = vld [vmem:[%s230] sm:$0xff]
    %v232 = vld [vmem:[%s230 + $0x10] sm:$0xff]
    %v233 = vld [vmem:[%s230 + $0x20] sm:$0xff]
    %v234 = vld [vmem:[%s230 + $0x30] sm:$0xff]
    %v235 = vld [vmem:[%s230 + $0x40] sm:$0xff]
    %v236 = vld [vmem:[%s230 + $0x50] sm:$0xff]
    %v237 = vld [vmem:[%s230 + $0x60] sm:$0xff]
    %v238 = vld [vmem:[%s230 + $0x70] sm:$0xff]
    %247 = vrot.lane.b32.xlu0 %v231, 20
    %v248 = vpop.permute.xlu0 %247
    %249 = vrot.lane.b32.xlu0 %v232, 20
    %v250 = vpop.permute.xlu0 %249
    %251 = vrot.lane.b32.xlu0 %v233, 20
    %v252 = vpop.permute.xlu0 %251
    %253 = vrot.lane.b32.xlu0 %v234, 20
    %v254 = vpop.permute.xlu0 %253
    %255 = vrot.lane.b32.xlu0 %v235, 20
    %v256 = vpop.permute.xlu0 %255
    %257 = vrot.lane.b32.xlu0 %v236, 20
    %v258 = vpop.permute.xlu0 %257
    %259 = vrot.lane.b32.xlu0 %v237, 20
    %v260 = vpop.permute.xlu0 %259
    %261 = vrot.lane.b32.xlu0 %v238, 20
    %v262 = vpop.permute.xlu0 %261
    %vm271 = vcmask 195744
    %272 = vst.msk [vmem:[#allocation2] sm:$0xff] %vm271, %v248
    %273 = vst.msk [vmem:[#allocation2 + $0x8] sm:$0xff] %vm271, %v250
    %274 = vst.msk [vmem:[#allocation2 + $0x10] sm:$0xff] %vm271, %v252
    %275 = vst.msk [vmem:[#allocation2 + $0x18] sm:$0xff] %vm271, %v254
    %276 = vst.msk [vmem:[#allocation2 + $0x20] sm:$0xff] %vm271, %v256
    %277 = vst.msk [vmem:[#allocation2 + $0x28] sm:$0xff] %vm271, %v258
    %278 = vst.msk [vmem:[#allocation2 + $0x30] sm:$0xff] %vm271, %v260
    %279 = vst.msk [vmem:[#allocation2 + $0x38] sm:$0xff] %vm271, %v262
    %v280 = vld [vmem:[%s180 + $0x1] sm:$0xff]
    %v281 = vld [vmem:[%s180 + $0x11] sm:$0xff]
    %v282 = vld [vmem:[%s180 + $0x21] sm:$0xff]
    %v283 = vld [vmem:[%s180 + $0x31] sm:$0xff]
    %v284 = vld [vmem:[%s180 + $0x41] sm:$0xff]
    %v285 = vld [vmem:[%s180 + $0x51] sm:$0xff]
    %v286 = vld [vmem:[%s180 + $0x61] sm:$0xff]
    %v287 = vld [vmem:[%s180 + $0x71] sm:$0xff]
    %296 = vrot.lane.b32.xlu0 %v280, 24
    %v297 = vpop.permute.xlu0 %296
    %298 = vrot.lane.b32.xlu0 %v281, 24
    %v299 = vpop.permute.xlu0 %298
    %300 = vrot.lane.b32.xlu0 %v282, 24
    %v301 = vpop.permute.xlu0 %300
    %302 = vrot.lane.b32.xlu0 %v283, 24
    %v303 = vpop.permute.xlu0 %302
    %304 = vrot.lane.b32.xlu0 %v284, 24
    %v305 = vpop.permute.xlu0 %304
    %306 = vrot.lane.b32.xlu0 %v285, 24
    %v307 = vpop.permute.xlu0 %306
    %308 = vrot.lane.b32.xlu0 %v286, 24
    %v309 = vpop.permute.xlu0 %308
    %310 = vrot.lane.b32.xlu0 %v287, 24
    %v311 = vpop.permute.xlu0 %310
    %vm320 = vcmask 228544
    %321 = vst.msk [vmem:[#allocation2] sm:$0xff] %vm320, %v297
    %322 = vst.msk [vmem:[#allocation2 + $0x8] sm:$0xff] %vm320, %v299
    %323 = vst.msk [vmem:[#allocation2 + $0x10] sm:$0xff] %vm320, %v301
    %324 = vst.msk [vmem:[#allocation2 + $0x18] sm:$0xff] %vm320, %v303
    %325 = vst.msk [vmem:[#allocation2 + $0x20] sm:$0xff] %vm320, %v305
    %326 = vst.msk [vmem:[#allocation2 + $0x28] sm:$0xff] %vm320, %v307
    %327 = vst.msk [vmem:[#allocation2 + $0x30] sm:$0xff] %vm320, %v309
    %328 = vst.msk [vmem:[#allocation2 + $0x38] sm:$0xff] %vm320, %v311
    %v329 = vld [vmem:[%s230 + $0x1] sm:$0xff]
    %v330 = vld [vmem:[%s230 + $0x11] sm:$0xff]
    %v331 = vld [vmem:[%s230 + $0x21] sm:$0xff]
    %v332 = vld [vmem:[%s230 + $0x31] sm:$0xff]
    %v333 = vld [vmem:[%s230 + $0x41] sm:$0xff]
    %v334 = vld [vmem:[%s230 + $0x51] sm:$0xff]
    %v335 = vld [vmem:[%s230 + $0x61] sm:$0xff]
    %v336 = vld [vmem:[%s230 + $0x71] sm:$0xff]
    %345 = vrot.lane.b32.xlu0 %v329, 28
    %v346 = vpop.permute.xlu0 %345
    %347 = vrot.lane.b32.xlu0 %v330, 28
    %v348 = vpop.permute.xlu0 %347
    %349 = vrot.lane.b32.xlu0 %v331, 28
    %v350 = vpop.permute.xlu0 %349
    %351 = vrot.lane.b32.xlu0 %v332, 28
    %v352 = vpop.permute.xlu0 %351
    %353 = vrot.lane.b32.xlu0 %v333, 28
    %v354 = vpop.permute.xlu0 %353
    %355 = vrot.lane.b32.xlu0 %v334, 28
    %v356 = vpop.permute.xlu0 %355
    %357 = vrot.lane.b32.xlu0 %v335, 28
    %v358 = vpop.permute.xlu0 %357
    %359 = vrot.lane.b32.xlu0 %v336, 28
    %v360 = vpop.permute.xlu0 %359
    %vm369 = vcmask 261344
    %370 = vst.msk [vmem:[#allocation2] sm:$0xff] %vm369, %v346
    %371 = vst.msk [vmem:[#allocation2 + $0x8] sm:$0xff] %vm369, %v348
    %372 = vst.msk [vmem:[#allocation2 + $0x10] sm:$0xff] %vm369, %v350
    %373 = vst.msk [vmem:[#allocation2 + $0x18] sm:$0xff] %vm369, %v352
    %374 = vst.msk [vmem:[#allocation2 + $0x20] sm:$0xff] %vm369, %v354
    %375 = vst.msk [vmem:[#allocation2 + $0x28] sm:$0xff] %vm369, %v356
    %376 = vst.msk [vmem:[#allocation2 + $0x30] sm:$0xff] %vm369, %v358
    %377 = vst.msk [vmem:[#allocation2 + $0x38] sm:$0xff] %vm369, %v360
    %s378 = scalar_lea.vmem %s0, 16
    %v379 = vld [vmem:[%s378] sm:$0xff]
    %v380 = vld [vmem:[%s378 + $0x10] sm:$0xff]
    %v381 = vld [vmem:[%s378 + $0x20] sm:$0xff]
    %v382 = vld [vmem:[%s378 + $0x30] sm:$0xff]
    %v383 = vld [vmem:[%s378 + $0x40] sm:$0xff]
    %v384 = vld [vmem:[%s378 + $0x50] sm:$0xff]
    %v385 = vld [vmem:[%s378 + $0x60] sm:$0xff]
    %v386 = vld [vmem:[%s378 + $0x70] sm:$0xff]
    %395 = vrot.lane.b32.xlu0 %v379, 32
    %v396 = vpop.permute.xlu0 %395
    %397 = vrot.lane.b32.xlu0 %v380, 32
    %v398 = vpop.permute.xlu0 %397
    %399 = vrot.lane.b32.xlu0 %v381, 32
    %v400 = vpop.permute.xlu0 %399
    %401 = vrot.lane.b32.xlu0 %v382, 32
    %v402 = vpop.permute.xlu0 %401
    %403 = vrot.lane.b32.xlu0 %v383, 32
    %v404 = vpop.permute.xlu0 %403
    %405 = vrot.lane.b32.xlu0 %v384, 32
    %v406 = vpop.permute.xlu0 %405
    %407 = vrot.lane.b32.xlu0 %v385, 32
    %v408 = vpop.permute.xlu0 %407
    %409 = vrot.lane.b32.xlu0 %v386, 32
    %v410 = vpop.permute.xlu0 %409
    %vm419 = vcmask 294144
    %420 = vst.msk [vmem:[#allocation2] sm:$0xff] %vm419, %v396
    %421 = vst.msk [vmem:[#allocation2 + $0x8] sm:$0xff] %vm419, %v398
    %422 = vst.msk [vmem:[#allocation2 + $0x10] sm:$0xff] %vm419, %v400
    %423 = vst.msk [vmem:[#allocation2 + $0x18] sm:$0xff] %vm419, %v402
    %424 = vst.msk [vmem:[#allocation2 + $0x20] sm:$0xff] %vm419, %v404
    %425 = vst.msk [vmem:[#allocation2 + $0x28] sm:$0xff] %vm419, %v406
    %426 = vst.msk [vmem:[#allocation2 + $0x30] sm:$0xff] %vm419, %v408
    %427 = vst.msk [vmem:[#allocation2 + $0x38] sm:$0xff] %vm419, %v410
    %s428 = scalar_lea.vmem %s0, 160
    %v429 = vld [vmem:[%s428] sm:$0xff]
    %v430 = vld [vmem:[%s428 + $0x10] sm:$0xff]
    %v431 = vld [vmem:[%s428 + $0x20] sm:$0xff]
    %v432 = vld [vmem:[%s428 + $0x30] sm:$0xff]
    %v433 = vld [vmem:[%s428 + $0x40] sm:$0xff]
    %v434 = vld [vmem:[%s428 + $0x50] sm:$0xff]
    %v435 = vld [vmem:[%s428 + $0x60] sm:$0xff]
    %v436 = vld [vmem:[%s428 + $0x70] sm:$0xff]
    %445 = vrot.lane.b32.xlu0 %v429, 36
    %v446 = vpop.permute.xlu0 %445
    %447 = vrot.lane.b32.xlu0 %v430, 36
    %v448 = vpop.permute.xlu0 %447
    %449 = vrot.lane.b32.xlu0 %v431, 36
    %v450 = vpop.permute.xlu0 %449
    %451 = vrot.lane.b32.xlu0 %v432, 36
    %v452 = vpop.permute.xlu0 %451
    %453 = vrot.lane.b32.xlu0 %v433, 36
    %v454 = vpop.permute.xlu0 %453
    %455 = vrot.lane.b32.xlu0 %v434, 36
    %v456 = vpop.permute.xlu0 %455
    %457 = vrot.lane.b32.xlu0 %v435, 36
    %v458 = vpop.permute.xlu0 %457
    %459 = vrot.lane.b32.xlu0 %v436, 36
    %v460 = vpop.permute.xlu0 %459
    %vm469 = vcmask 326944
    %470 = vst.msk [vmem:[#allocation2] sm:$0xff] %vm469, %v446
    %471 = vst.msk [vmem:[#allocation2 + $0x8] sm:$0xff] %vm469, %v448
    %472 = vst.msk [vmem:[#allocation2 + $0x10] sm:$0xff] %vm469, %v450
    %473 = vst.msk [vmem:[#allocation2 + $0x18] sm:$0xff] %vm469, %v452
    %474 = vst.msk [vmem:[#allocation2 + $0x20] sm:$0xff] %vm469, %v454
    %475 = vst.msk [vmem:[#allocation2 + $0x28] sm:$0xff] %vm469, %v456
    %476 = vst.msk [vmem:[#allocation2 + $0x30] sm:$0xff] %vm469, %v458
    %477 = vst.msk [vmem:[#allocation2 + $0x38] sm:$0xff] %vm469, %v460
    %v478 = vld [vmem:[%s378 + $0x1] sm:$0xff]
    %v479 = vld [vmem:[%s378 + $0x11] sm:$0xff]
    %v480 = vld [vmem:[%s378 + $0x21] sm:$0xff]
    %v481 = vld [vmem:[%s378 + $0x31] sm:$0xff]
    %v482 = vld [vmem:[%s378 + $0x41] sm:$0xff]
    %v483 = vld [vmem:[%s378 + $0x51] sm:$0xff]
    %v484 = vld [vmem:[%s378 + $0x61] sm:$0xff]
    %v485 = vld [vmem:[%s378 + $0x71] sm:$0xff]
    %494 = vrot.lane.b32.xlu0 %v478, 40
    %v495 = vpop.permute.xlu0 %494
    %496 = vrot.lane.b32.xlu0 %v479, 40
    %v497 = vpop.permute.xlu0 %496
    %498 = vrot.lane.b32.xlu0 %v480, 40
    %v499 = vpop.permute.xlu0 %498
    %500 = vrot.lane.b32.xlu0 %v481, 40
    %v501 = vpop.permute.xlu0 %500
    %502 = vrot.lane.b32.xlu0 %v482, 40
    %v503 = vpop.permute.xlu0 %502
    %504 = vrot.lane.b32.xlu0 %v483, 40
    %v505 = vpop.permute.xlu0 %504
    %506 = vrot.lane.b32.xlu0 %v484, 40
    %v507 = vpop.permute.xlu0 %506
    %508 = vrot.lane.b32.xlu0 %v485, 40
    %v509 = vpop.permute.xlu0 %508
    %vm518 = vcmask 359744
    %519 = vst.msk [vmem:[#allocation2] sm:$0xff] %vm518, %v495
    %520 = vst.msk [vmem:[#allocation2 + $0x8] sm:$0xff] %vm518, %v497
    %521 = vst.msk [vmem:[#allocation2 + $0x10] sm:$0xff] %vm518, %v499
    %522 = vst.msk [vmem:[#allocation2 + $0x18] sm:$0xff] %vm518, %v501
    %523 = vst.msk [vmem:[#allocation2 + $0x20] sm:$0xff] %vm518, %v503
    %524 = vst.msk [vmem:[#allocation2 + $0x28] sm:$0xff] %vm518, %v505
    %525 = vst.msk [vmem:[#allocation2 + $0x30] sm:$0xff] %vm518, %v507
    %526 = vst.msk [vmem:[#allocation2 + $0x38] sm:$0xff] %vm518, %v509
    %v527 = vld [vmem:[%s428 + $0x1] sm:$0xff]
    %v528 = vld [vmem:[%s428 + $0x11] sm:$0xff]
    %v529 = vld [vmem:[%s428 + $0x21] sm:$0xff]
    %v530 = vld [vmem:[%s428 + $0x31] sm:$0xff]
    %v531 = vld [vmem:[%s428 + $0x41] sm:$0xff]
    %v532 = vld [vmem:[%s428 + $0x51] sm:$0xff]
    %v533 = vld [vmem:[%s428 + $0x61] sm:$0xff]
    %v534 = vld [vmem:[%s428 + $0x71] sm:$0xff]
    %543 = vrot.lane.b32.xlu0 %v527, 44
    %v544 = vpop.permute.xlu0 %543
    %545 = vrot.lane.b32.xlu0 %v528, 44
    %v546 = vpop.permute.xlu0 %545
    %547 = vrot.lane.b32.xlu0 %v529, 44
    %v548 = vpop.permute.xlu0 %547
    %549 = vrot.lane.b32.xlu0 %v530, 44
    %v550 = vpop.permute.xlu0 %549
    %551 = vrot.lane.b32.xlu0 %v531, 44
    %v552 = vpop.permute.xlu0 %551
    %553 = vrot.lane.b32.xlu0 %v532, 44
    %v554 = vpop.permute.xlu0 %553
    %555 = vrot.lane.b32.xlu0 %v533, 44
    %v556 = vpop.permute.xlu0 %555
    %557 = vrot.lane.b32.xlu0 %v534, 44
    %v558 = vpop.permute.xlu0 %557
    %vm567 = vcmask 392544
    %568 = vst.msk [vmem:[#allocation2] sm:$0xff] %vm567, %v544
    %569 = vst.msk [vmem:[#allocation2 + $0x8] sm:$0xff] %vm567, %v546
    %570 = vst.msk [vmem:[#allocation2 + $0x10] sm:$0xff] %vm567, %v548
    %571 = vst.msk [vmem:[#allocation2 + $0x18] sm:$0xff] %vm567, %v550
    %572 = vst.msk [vmem:[#allocation2 + $0x20] sm:$0xff] %vm567, %v552
    %573 = vst.msk [vmem:[#allocation2 + $0x28] sm:$0xff] %vm567, %v554
    %574 = vst.msk [vmem:[#allocation2 + $0x30] sm:$0xff] %vm567, %v556
    %575 = vst.msk [vmem:[#allocation2 + $0x38] sm:$0xff] %vm567, %v558
    %s576 = scalar_lea.vmem %s0, 304
    %v577 = vld [vmem:[%s576] sm:$0xff]
    %v578 = vld [vmem:[%s576 + $0x10] sm:$0xff]
    %v579 = vld [vmem:[%s576 + $0x20] sm:$0xff]
    %v580 = vld [vmem:[%s576 + $0x30] sm:$0xff]
    %v581 = vld [vmem:[%s576 + $0x40] sm:$0xff]
    %v582 = vld [vmem:[%s576 + $0x50] sm:$0xff]
    %v583 = vld [vmem:[%s576 + $0x60] sm:$0xff]
    %v584 = vld [vmem:[%s576 + $0x70] sm:$0xff]
    %593 = vrot.lane.b32.xlu0 %v577, 48
    %v594 = vpop.permute.xlu0 %593
    %595 = vrot.lane.b32.xlu0 %v578, 48
    %v596 = vpop.permute.xlu0 %595
    %597 = vrot.lane.b32.xlu0 %v579, 48
    %v598 = vpop.permute.xlu0 %597
    %599 = vrot.lane.b32.xlu0 %v580, 48
    %v600 = vpop.permute.xlu0 %599
    %601 = vrot.lane.b32.xlu0 %v581, 48
    %v602 = vpop.permute.xlu0 %601
    %603 = vrot.lane.b32.xlu0 %v582, 48
    %v604 = vpop.permute.xlu0 %603
    %605 = vrot.lane.b32.xlu0 %v583, 48
    %v606 = vpop.permute.xlu0 %605
    %607 = vrot.lane.b32.xlu0 %v584, 48
    %v608 = vpop.permute.xlu0 %607
    %vm617 = vcmask 425344
    %618 = vst.msk [vmem:[#allocation2] sm:$0xff] %vm617, %v594
    %619 = vst.msk [vmem:[#allocation2 + $0x8] sm:$0xff] %vm617, %v596
    %620 = vst.msk [vmem:[#allocation2 + $0x10] sm:$0xff] %vm617, %v598
    %621 = vst.msk [vmem:[#allocation2 + $0x18] sm:$0xff] %vm617, %v600
    %622 = vst.msk [vmem:[#allocation2 + $0x20] sm:$0xff] %vm617, %v602
    %623 = vst.msk [vmem:[#allocation2 + $0x28] sm:$0xff] %vm617, %v604
    %624 = vst.msk [vmem:[#allocation2 + $0x30] sm:$0xff] %vm617, %v606
    %625 = vst.msk [vmem:[#allocation2 + $0x38] sm:$0xff] %vm617, %v608
    %s626 = scalar_lea.vmem %s0, 448
    %v627 = vld [vmem:[%s626] sm:$0xff]
    %v628 = vld [vmem:[%s626 + $0x10] sm:$0xff]
    %v629 = vld [vmem:[%s626 + $0x20] sm:$0xff]
    %v630 = vld [vmem:[%s626 + $0x30] sm:$0xff]
    %v631 = vld [vmem:[%s626 + $0x40] sm:$0xff]
    %v632 = vld [vmem:[%s626 + $0x50] sm:$0xff]
    %v633 = vld [vmem:[%s626 + $0x60] sm:$0xff]
    %v634 = vld [vmem:[%s626 + $0x70] sm:$0xff]
    %643 = vrot.lane.b32.xlu0 %v627, 52
    %v644 = vpop.permute.xlu0 %643
    %645 = vrot.lane.b32.xlu0 %v628, 52
    %v646 = vpop.permute.xlu0 %645
    %647 = vrot.lane.b32.xlu0 %v629, 52
    %v648 = vpop.permute.xlu0 %647
    %649 = vrot.lane.b32.xlu0 %v630, 52
    %v650 = vpop.permute.xlu0 %649
    %651 = vrot.lane.b32.xlu0 %v631, 52
    %v652 = vpop.permute.xlu0 %651
    %653 = vrot.lane.b32.xlu0 %v632, 52
    %v654 = vpop.permute.xlu0 %653
    %655 = vrot.lane.b32.xlu0 %v633, 52
    %v656 = vpop.permute.xlu0 %655
    %657 = vrot.lane.b32.xlu0 %v634, 52
    %v658 = vpop.permute.xlu0 %657
    %vm667 = vcmask 458144
    %668 = vst.msk [vmem:[#allocation2] sm:$0xff] %vm667, %v644
    %669 = vst.msk [vmem:[#allocation2 + $0x8] sm:$0xff] %vm667, %v646
    %670 = vst.msk [vmem:[#allocation2 + $0x10] sm:$0xff] %vm667, %v648
    %671 = vst.msk [vmem:[#allocation2 + $0x18] sm:$0xff] %vm667, %v650
    %672 = vst.msk [vmem:[#allocation2 + $0x20] sm:$0xff] %vm667, %v652
    %673 = vst.msk [vmem:[#allocation2 + $0x28] sm:$0xff] %vm667, %v654
    %674 = vst.msk [vmem:[#allocation2 + $0x30] sm:$0xff] %vm667, %v656
    %675 = vst.msk [vmem:[#allocation2 + $0x38] sm:$0xff] %vm667, %v658
    %v676 = vld [vmem:[%s576 + $0x1] sm:$0xff]
    %v677 = vld [vmem:[%s576 + $0x11] sm:$0xff]
    %v678 = vld [vmem:[%s576 + $0x21] sm:$0xff]
    %v679 = vld [vmem:[%s576 + $0x31] sm:$0xff]
    %v680 = vld [vmem:[%s576 + $0x41] sm:$0xff]
    %v681 = vld [vmem:[%s576 + $0x51] sm:$0xff]
    %v682 = vld [vmem:[%s576 + $0x61] sm:$0xff]
    %v683 = vld [vmem:[%s576 + $0x71] sm:$0xff]
    %692 = vrot.lane.b32.xlu0 %v676, 56
    %v693 = vpop.permute.xlu0 %692
    %694 = vrot.lane.b32.xlu0 %v677, 56
    %v695 = vpop.permute.xlu0 %694
    %696 = vrot.lane.b32.xlu0 %v678, 56
    %v697 = vpop.permute.xlu0 %696
    %698 = vrot.lane.b32.xlu0 %v679, 56
    %v699 = vpop.permute.xlu0 %698
    %700 = vrot.lane.b32.xlu0 %v680, 56
    %v701 = vpop.permute.xlu0 %700
    %702 = vrot.lane.b32.xlu0 %v681, 56
    %v703 = vpop.permute.xlu0 %702
    %704 = vrot.lane.b32.xlu0 %v682, 56
    %v705 = vpop.permute.xlu0 %704
    %706 = vrot.lane.b32.xlu0 %v683, 56
    %v707 = vpop.permute.xlu0 %706
    %vm716 = vcmask 490944
    %717 = vst.msk [vmem:[#allocation2] sm:$0xff] %vm716, %v693
    %718 = vst.msk [vmem:[#allocation2 + $0x8] sm:$0xff] %vm716, %v695
    %719 = vst.msk [vmem:[#allocation2 + $0x10] sm:$0xff] %vm716, %v697
    %720 = vst.msk [vmem:[#allocation2 + $0x18] sm:$0xff] %vm716, %v699
    %721 = vst.msk [vmem:[#allocation2 + $0x20] sm:$0xff] %vm716, %v701
    %722 = vst.msk [vmem:[#allocation2 + $0x28] sm:$0xff] %vm716, %v703
    %723 = vst.msk [vmem:[#allocation2 + $0x30] sm:$0xff] %vm716, %v705
    %724 = vst.msk [vmem:[#allocation2 + $0x38] sm:$0xff] %vm716, %v707
    %v725 = vld [vmem:[%s626 + $0x1] sm:$0xff]
    %v726 = vld [vmem:[%s626 + $0x11] sm:$0xff]
    %v727 = vld [vmem:[%s626 + $0x21] sm:$0xff]
    %v728 = vld [vmem:[%s626 + $0x31] sm:$0xff]
    %v729 = vld [vmem:[%s626 + $0x41] sm:$0xff]
    %v730 = vld [vmem:[%s626 + $0x51] sm:$0xff]
    %v731 = vld [vmem:[%s626 + $0x61] sm:$0xff]
    %v732 = vld [vmem:[%s626 + $0x71] sm:$0xff]
    %741 = vrot.lane.b32.xlu0 %v725, 60
    %v742 = vpop.permute.xlu0 %741
    %743 = vrot.lane.b32.xlu0 %v726, 60
    %v744 = vpop.permute.xlu0 %743
    %745 = vrot.lane.b32.xlu0 %v727, 60
    %v746 = vpop.permute.xlu0 %745
    %747 = vrot.lane.b32.xlu0 %v728, 60
    %v748 = vpop.permute.xlu0 %747
    %749 = vrot.lane.b32.xlu0 %v729, 60
    %v750 = vpop.permute.xlu0 %749
    %751 = vrot.lane.b32.xlu0 %v730, 60
    %v752 = vpop.permute.xlu0 %751
    %753 = vrot.lane.b32.xlu0 %v731, 60
    %v754 = vpop.permute.xlu0 %753
    %755 = vrot.lane.b32.xlu0 %v732, 60
    %v756 = vpop.permute.xlu0 %755
    %vm765 = vcmask 523744
    %766 = vst.msk [vmem:[#allocation2] sm:$0xff] %vm765, %v742
    %767 = vst.msk [vmem:[#allocation2 + $0x8] sm:$0xff] %vm765, %v744
    %768 = vst.msk [vmem:[#allocation2 + $0x10] sm:$0xff] %vm765, %v746
    %769 = vst.msk [vmem:[#allocation2 + $0x18] sm:$0xff] %vm765, %v748
    %770 = vst.msk [vmem:[#allocation2 + $0x20] sm:$0xff] %vm765, %v750
    %771 = vst.msk [vmem:[#allocation2 + $0x28] sm:$0xff] %vm765, %v752
    %772 = vst.msk [vmem:[#allocation2 + $0x30] sm:$0xff] %vm765, %v754
    %773 = vst.msk [vmem:[#allocation2 + $0x38] sm:$0xff] %vm765, %v756
    %s774 = scalar_lea.vmem %s0, 576
    %v775 = vld [vmem:[%s774] sm:$0xff]
    %v776 = vld [vmem:[%s774 + $0x10] sm:$0xff]
    %v777 = vld [vmem:[%s774 + $0x20] sm:$0xff]
    %v778 = vld [vmem:[%s774 + $0x30] sm:$0xff]
    %v779 = vld [vmem:[%s774 + $0x40] sm:$0xff]
    %v780 = vld [vmem:[%s774 + $0x50] sm:$0xff]
    %v781 = vld [vmem:[%s774 + $0x60] sm:$0xff]
    %v782 = vld [vmem:[%s774 + $0x70] sm:$0xff]
    %783 = vst.msk [vmem:[#allocation2 + $0x40] sm:$0xff] %vm23, %v775
    %784 = vst.msk [vmem:[#allocation2 + $0x48] sm:$0xff] %vm23, %v776
    %785 = vst.msk [vmem:[#allocation2 + $0x50] sm:$0xff] %vm23, %v777
    %786 = vst.msk [vmem:[#allocation2 + $0x58] sm:$0xff] %vm23, %v778
    %787 = vst.msk [vmem:[#allocation2 + $0x60] sm:$0xff] %vm23, %v779
    %788 = vst.msk [vmem:[#allocation2 + $0x68] sm:$0xff] %vm23, %v780
    %789 = vst.msk [vmem:[#allocation2 + $0x70] sm:$0xff] %vm23, %v781
    %790 = vst.msk [vmem:[#allocation2 + $0x78] sm:$0xff] %vm23, %v782
    %s791 = scalar_lea.vmem %s0, 720
    %v792 = vld [vmem:[%s791] sm:$0xff]
    %v793 = vld [vmem:[%s791 + $0x10] sm:$0xff]
    %v794 = vld [vmem:[%s791 + $0x20] sm:$0xff]
    %v795 = vld [vmem:[%s791 + $0x30] sm:$0xff]
    %v796 = vld [vmem:[%s791 + $0x40] sm:$0xff]
    %v797 = vld [vmem:[%s791 + $0x50] sm:$0xff]
    %v798 = vld [vmem:[%s791 + $0x60] sm:$0xff]
    %v799 = vld [vmem:[%s791 + $0x70] sm:$0xff]
    %808 = vrot.lane.b32.xlu0 %v792, 4
    %v809 = vpop.permute.xlu0 %808
    %810 = vrot.lane.b32.xlu0 %v793, 4
    %v811 = vpop.permute.xlu0 %810
    %812 = vrot.lane.b32.xlu0 %v794, 4
    %v813 = vpop.permute.xlu0 %812
    %814 = vrot.lane.b32.xlu0 %v795, 4
    %v815 = vpop.permute.xlu0 %814
    %816 = vrot.lane.b32.xlu0 %v796, 4
    %v817 = vpop.permute.xlu0 %816
    %818 = vrot.lane.b32.xlu0 %v797, 4
    %v819 = vpop.permute.xlu0 %818
    %820 = vrot.lane.b32.xlu0 %v798, 4
    %v821 = vpop.permute.xlu0 %820
    %822 = vrot.lane.b32.xlu0 %v799, 4
    %v823 = vpop.permute.xlu0 %822
    %832 = vst.msk [vmem:[#allocation2 + $0x40] sm:$0xff] %vm73, %v809
    %833 = vst.msk [vmem:[#allocation2 + $0x48] sm:$0xff] %vm73, %v811
    %834 = vst.msk [vmem:[#allocation2 + $0x50] sm:$0xff] %vm73, %v813
    %835 = vst.msk [vmem:[#allocation2 + $0x58] sm:$0xff] %vm73, %v815
    %836 = vst.msk [vmem:[#allocation2 + $0x60] sm:$0xff] %vm73, %v817
    %837 = vst.msk [vmem:[#allocation2 + $0x68] sm:$0xff] %vm73, %v819
    %838 = vst.msk [vmem:[#allocation2 + $0x70] sm:$0xff] %vm73, %v821
    %839 = vst.msk [vmem:[#allocation2 + $0x78] sm:$0xff] %vm73, %v823
    %v840 = vld [vmem:[%s774 + $0x1] sm:$0xff]
    %v841 = vld [vmem:[%s774 + $0x11] sm:$0xff]
    %v842 = vld [vmem:[%s774 + $0x21] sm:$0xff]
    %v843 = vld [vmem:[%s774 + $0x31] sm:$0xff]
    %v844 = vld [vmem:[%s774 + $0x41] sm:$0xff]
    %v845 = vld [vmem:[%s774 + $0x51] sm:$0xff]
    %v846 = vld [vmem:[%s774 + $0x61] sm:$0xff]
    %v847 = vld [vmem:[%s774 + $0x71] sm:$0xff]
    %856 = vrot.lane.b32.xlu0 %v840, 8
    %v857 = vpop.permute.xlu0 %856
    %858 = vrot.lane.b32.xlu0 %v841, 8
    %v859 = vpop.permute.xlu0 %858
    %860 = vrot.lane.b32.xlu0 %v842, 8
    %v861 = vpop.permute.xlu0 %860
    %862 = vrot.lane.b32.xlu0 %v843, 8
    %v863 = vpop.permute.xlu0 %862
    %864 = vrot.lane.b32.xlu0 %v844, 8
    %v865 = vpop.permute.xlu0 %864
    %866 = vrot.lane.b32.xlu0 %v845, 8
    %v867 = vpop.permute.xlu0 %866
    %868 = vrot.lane.b32.xlu0 %v846, 8
    %v869 = vpop.permute.xlu0 %868
    %870 = vrot.lane.b32.xlu0 %v847, 8
    %v871 = vpop.permute.xlu0 %870
    %880 = vst.msk [vmem:[#allocation2 + $0x40] sm:$0xff] %vm122, %v857
    %881 = vst.msk [vmem:[#allocation2 + $0x48] sm:$0xff] %vm122, %v859
    %882 = vst.msk [vmem:[#allocation2 + $0x50] sm:$0xff] %vm122, %v861
    %883 = vst.msk [vmem:[#allocation2 + $0x58] sm:$0xff] %vm122, %v863
    %884 = vst.msk [vmem:[#allocation2 + $0x60] sm:$0xff] %vm122, %v865
    %885 = vst.msk [vmem:[#allocation2 + $0x68] sm:$0xff] %vm122, %v867
    %886 = vst.msk [vmem:[#allocation2 + $0x70] sm:$0xff] %vm122, %v869
    %887 = vst.msk [vmem:[#allocation2 + $0x78] sm:$0xff] %vm122, %v871
    %v888 = vld [vmem:[%s791 + $0x1] sm:$0xff]
    %v889 = vld [vmem:[%s791 + $0x11] sm:$0xff]
    %v890 = vld [vmem:[%s791 + $0x21] sm:$0xff]
    %v891 = vld [vmem:[%s791 + $0x31] sm:$0xff]
    %v892 = vld [vmem:[%s791 + $0x41] sm:$0xff]
    %v893 = vld [vmem:[%s791 + $0x51] sm:$0xff]
    %v894 = vld [vmem:[%s791 + $0x61] sm:$0xff]
    %v895 = vld [vmem:[%s791 + $0x71] sm:$0xff]
    %904 = vrot.lane.b32.xlu0 %v888, 12
    %v905 = vpop.permute.xlu0 %904
    %906 = vrot.lane.b32.xlu0 %v889, 12
    %v907 = vpop.permute.xlu0 %906
    %908 = vrot.lane.b32.xlu0 %v890, 12
    %v909 = vpop.permute.xlu0 %908
    %910 = vrot.lane.b32.xlu0 %v891, 12
    %v911 = vpop.permute.xlu0 %910
    %912 = vrot.lane.b32.xlu0 %v892, 12
    %v913 = vpop.permute.xlu0 %912
    %914 = vrot.lane.b32.xlu0 %v893, 12
    %v915 = vpop.permute.xlu0 %914
    %916 = vrot.lane.b32.xlu0 %v894, 12
    %v917 = vpop.permute.xlu0 %916
    %918 = vrot.lane.b32.xlu0 %v895, 12
    %v919 = vpop.permute.xlu0 %918
    %928 = vst.msk [vmem:[#allocation2 + $0x40] sm:$0xff] %vm171, %v905
    %929 = vst.msk [vmem:[#allocation2 + $0x48] sm:$0xff] %vm171, %v907
    %930 = vst.msk [vmem:[#allocation2 + $0x50] sm:$0xff] %vm171, %v909
    %931 = vst.msk [vmem:[#allocation2 + $0x58] sm:$0xff] %vm171, %v911
    %932 = vst.msk [vmem:[#allocation2 + $0x60] sm:$0xff] %vm171, %v913
    %933 = vst.msk [vmem:[#allocation2 + $0x68] sm:$0xff] %vm171, %v915
    %934 = vst.msk [vmem:[#allocation2 + $0x70] sm:$0xff] %vm171, %v917
    %935 = vst.msk [vmem:[#allocation2 + $0x78] sm:$0xff] %vm171, %v919
    %s936 = scalar_lea.vmem %s0, 864
    %v937 = vld [vmem:[%s936] sm:$0xff]
    %v938 = vld [vmem:[%s936 + $0x10] sm:$0xff]
    %v939 = vld [vmem:[%s936 + $0x20] sm:$0xff]
    %v940 = vld [vmem:[%s936 + $0x30] sm:$0xff]
    %v941 = vld [vmem:[%s936 + $0x40] sm:$0xff]
    %v942 = vld [vmem:[%s936 + $0x50] sm:$0xff]
    %v943 = vld [vmem:[%s936 + $0x60] sm:$0xff]
    %v944 = vld [vmem:[%s936 + $0x70] sm:$0xff]
    %953 = vrot.lane.b32.xlu0 %v937, 16
    %v954 = vpop.permute.xlu0 %953
    %955 = vrot.lane.b32.xlu0 %v938, 16
    %v956 = vpop.permute.xlu0 %955
    %957 = vrot.lane.b32.xlu0 %v939, 16
    %v958 = vpop.permute.xlu0 %957
    %959 = vrot.lane.b32.xlu0 %v940, 16
    %v960 = vpop.permute.xlu0 %959
    %961 = vrot.lane.b32.xlu0 %v941, 16
    %v962 = vpop.permute.xlu0 %961
    %963 = vrot.lane.b32.xlu0 %v942, 16
    %v964 = vpop.permute.xlu0 %963
    %965 = vrot.lane.b32.xlu0 %v943, 16
    %v966 = vpop.permute.xlu0 %965
    %967 = vrot.lane.b32.xlu0 %v944, 16
    %v968 = vpop.permute.xlu0 %967
    %977 = vst.msk [vmem:[#allocation2 + $0x40] sm:$0xff] %vm221, %v954
    %978 = vst.msk [vmem:[#allocation2 + $0x48] sm:$0xff] %vm221, %v956
    %979 = vst.msk [vmem:[#allocation2 + $0x50] sm:$0xff] %vm221, %v958
    %980 = vst.msk [vmem:[#allocation2 + $0x58] sm:$0xff] %vm221, %v960
    %981 = vst.msk [vmem:[#allocation2 + $0x60] sm:$0xff] %vm221, %v962
    %982 = vst.msk [vmem:[#allocation2 + $0x68] sm:$0xff] %vm221, %v964
    %983 = vst.msk [vmem:[#allocation2 + $0x70] sm:$0xff] %vm221, %v966
    %984 = vst.msk [vmem:[#allocation2 + $0x78] sm:$0xff] %vm221, %v968
    %s985 = scalar_lea.vmem %s0, 1008
    %v986 = vld [vmem:[%s985] sm:$0xff]
    %v987 = vld [vmem:[%s985 + $0x10] sm:$0xff]
    %v988 = vld [vmem:[%s985 + $0x20] sm:$0xff]
    %v989 = vld [vmem:[%s985 + $0x30] sm:$0xff]
    %v990 = vld [vmem:[%s985 + $0x40] sm:$0xff]
    %v991 = vld [vmem:[%s985 + $0x50] sm:$0xff]
    %v992 = vld [vmem:[%s985 + $0x60] sm:$0xff]
    %v993 = vld [vmem:[%s985 + $0x70] sm:$0xff]
    %1002 = vrot.lane.b32.xlu0 %v986, 20
    %v1003 = vpop.permute.xlu0 %1002
    %1004 = vrot.lane.b32.xlu0 %v987, 20
    %v1005 = vpop.permute.xlu0 %1004
    %1006 = vrot.lane.b32.xlu0 %v988, 20
    %v1007 = vpop.permute.xlu0 %1006
    %1008 = vrot.lane.b32.xlu0 %v989, 20
    %v1009 = vpop.permute.xlu0 %1008
    %1010 = vrot.lane.b32.xlu0 %v990, 20
    %v1011 = vpop.permute.xlu0 %1010
    %1012 = vrot.lane.b32.xlu0 %v991, 20
    %v1013 = vpop.permute.xlu0 %1012
    %1014 = vrot.lane.b32.xlu0 %v992, 20
    %v1015 = vpop.permute.xlu0 %1014
    %1016 = vrot.lane.b32.xlu0 %v993, 20
    %v1017 = vpop.permute.xlu0 %1016
    %1026 = vst.msk [vmem:[#allocation2 + $0x40] sm:$0xff] %vm271, %v1003
    %1027 = vst.msk [vmem:[#allocation2 + $0x48] sm:$0xff] %vm271, %v1005
    %1028 = vst.msk [vmem:[#allocation2 + $0x50] sm:$0xff] %vm271, %v1007
    %1029 = vst.msk [vmem:[#allocation2 + $0x58] sm:$0xff] %vm271, %v1009
    %1030 = vst.msk [vmem:[#allocation2 + $0x60] sm:$0xff] %vm271, %v1011
    %1031 = vst.msk [vmem:[#allocation2 + $0x68] sm:$0xff] %vm271, %v1013
    %1032 = vst.msk [vmem:[#allocation2 + $0x70] sm:$0xff] %vm271, %v1015
    %1033 = vst.msk [vmem:[#allocation2 + $0x78] sm:$0xff] %vm271, %v1017
    %v1034 = vld [vmem:[%s936 + $0x1] sm:$0xff]
    %v1035 = vld [vmem:[%s936 + $0x11] sm:$0xff]
    %v1036 = vld [vmem:[%s936 + $0x21] sm:$0xff]
    %v1037 = vld [vmem:[%s936 + $0x31] sm:$0xff]
    %v1038 = vld [vmem:[%s936 + $0x41] sm:$0xff]
    %v1039 = vld [vmem:[%s936 + $0x51] sm:$0xff]
    %v1040 = vld [vmem:[%s936 + $0x61] sm:$0xff]
    %v1041 = vld [vmem:[%s936 + $0x71] sm:$0xff]
    %1050 = vrot.lane.b32.xlu0 %v1034, 24
    %v1051 = vpop.permute.xlu0 %1050
    %1052 = vrot.lane.b32.xlu0 %v1035, 24
    %v1053 = vpop.permute.xlu0 %1052
    %1054 = vrot.lane.b32.xlu0 %v1036, 24
    %v1055 = vpop.permute.xlu0 %1054
    %1056 = vrot.lane.b32.xlu0 %v1037, 24
    %v1057 = vpop.permute.xlu0 %1056
    %1058 = vrot.lane.b32.xlu0 %v1038, 24
    %v1059 = vpop.permute.xlu0 %1058
    %1060 = vrot.lane.b32.xlu0 %v1039, 24
    %v1061 = vpop.permute.xlu0 %1060
    %1062 = vrot.lane.b32.xlu0 %v1040, 24
    %v1063 = vpop.permute.xlu0 %1062
    %1064 = vrot.lane.b32.xlu0 %v1041, 24
    %v1065 = vpop.permute.xlu0 %1064
    %1074 = vst.msk [vmem:[#allocation2 + $0x40] sm:$0xff] %vm320, %v1051
    %1075 = vst.msk [vmem:[#allocation2 + $0x48] sm:$0xff] %vm320, %v1053
    %1076 = vst.msk [vmem:[#allocation2 + $0x50] sm:$0xff] %vm320, %v1055
    %1077 = vst.msk [vmem:[#allocation2 + $0x58] sm:$0xff] %vm320, %v1057
    %1078 = vst.msk [vmem:[#allocation2 + $0x60] sm:$0xff] %vm320, %v1059
    %1079 = vst.msk [vmem:[#allocation2 + $0x68] sm:$0xff] %vm320, %v1061
    %1080 = vst.msk [vmem:[#allocation2 + $0x70] sm:$0xff] %vm320, %v1063
    %1081 = vst.msk [vmem:[#allocation2 + $0x78] sm:$0xff] %vm320, %v1065
    %v1082 = vld [vmem:[%s985 + $0x1] sm:$0xff]
    %v1083 = vld [vmem:[%s985 + $0x11] sm:$0xff]
    %v1084 = vld [vmem:[%s985 + $0x21] sm:$0xff]
    %v1085 = vld [vmem:[%s985 + $0x31] sm:$0xff]
    %v1086 = vld [vmem:[%s985 + $0x41] sm:$0xff]
    %v1087 = vld [vmem:[%s985 + $0x51] sm:$0xff]
    %v1088 = vld [vmem:[%s985 + $0x61] sm:$0xff]
    %v1089 = vld [vmem:[%s985 + $0x71] sm:$0xff]
    %1098 = vrot.lane.b32.xlu0 %v1082, 28
    %v1099 = vpop.permute.xlu0 %1098
    %1100 = vrot.lane.b32.xlu0 %v1083, 28
    %v1101 = vpop.permute.xlu0 %1100
    %1102 = vrot.lane.b32.xlu0 %v1084, 28
    %v1103 = vpop.permute.xlu0 %1102
    %1104 = vrot.lane.b32.xlu0 %v1085, 28
    %v1105 = vpop.permute.xlu0 %1104
    %1106 = vrot.lane.b32.xlu0 %v1086, 28
    %v1107 = vpop.permute.xlu0 %1106
    %1108 = vrot.lane.b32.xlu0 %v1087, 28
    %v1109 = vpop.permute.xlu0 %1108
    %1110 = vrot.lane.b32.xlu0 %v1088, 28
    %v1111 = vpop.permute.xlu0 %1110
    %1112 = vrot.lane.b32.xlu0 %v1089, 28
    %v1113 = vpop.permute.xlu0 %1112
    %1122 = vst.msk [vmem:[#allocation2 + $0x40] sm:$0xff] %vm369, %v1099
    %1123 = vst.msk [vmem:[#allocation2 + $0x48] sm:$0xff] %vm369, %v1101
    %1124 = vst.msk [vmem:[#allocation2 + $0x50] sm:$0xff] %vm369, %v1103
    %1125 = vst.msk [vmem:[#allocation2 + $0x58] sm:$0xff] %vm369, %v1105
    %1126 = vst.msk [vmem:[#allocation2 + $0x60] sm:$0xff] %vm369, %v1107
    %1127 = vst.msk [vmem:[#allocation2 + $0x68] sm:$0xff] %vm369, %v1109
    %1128 = vst.msk [vmem:[#allocation2 + $0x70] sm:$0xff] %vm369, %v1111
    %1129 = vst.msk [vmem:[#allocation2 + $0x78] sm:$0xff] %vm369, %v1113
    %s1130 = scalar_lea.vmem %s0, 592
    %v1131 = vld [vmem:[%s1130] sm:$0xff]
    %v1132 = vld [vmem:[%s1130 + $0x10] sm:$0xff]
    %v1133 = vld [vmem:[%s1130 + $0x20] sm:$0xff]
    %v1134 = vld [vmem:[%s1130 + $0x30] sm:$0xff]
    %v1135 = vld [vmem:[%s1130 + $0x40] sm:$0xff]
    %v1136 = vld [vmem:[%s1130 + $0x50] sm:$0xff]
    %v1137 = vld [vmem:[%s1130 + $0x60] sm:$0xff]
    %v1138 = vld [vmem:[%s1130 + $0x70] sm:$0xff]
    %1147 = vrot.lane.b32.xlu0 %v1131, 32
    %v1148 = vpop.permute.xlu0 %1147
    %1149 = vrot.lane.b32.xlu0 %v1132, 32
    %v1150 = vpop.permute.xlu0 %1149
    %1151 = vrot.lane.b32.xlu0 %v1133, 32
    %v1152 = vpop.permute.xlu0 %1151
    %1153 = vrot.lane.b32.xlu0 %v1134, 32
    %v1154 = vpop.permute.xlu0 %1153
    %1155 = vrot.lane.b32.xlu0 %v1135, 32
    %v1156 = vpop.permute.xlu0 %1155
    %1157 = vrot.lane.b32.xlu0 %v1136, 32
    %v1158 = vpop.permute.xlu0 %1157
    %1159 = vrot.lane.b32.xlu0 %v1137, 32
    %v1160 = vpop.permute.xlu0 %1159
    %1161 = vrot.lane.b32.xlu0 %v1138, 32
    %v1162 = vpop.permute.xlu0 %1161
    %1171 = vst.msk [vmem:[#allocation2 + $0x40] sm:$0xff] %vm419, %v1148
    %1172 = vst.msk [vmem:[#allocation2 + $0x48] sm:$0xff] %vm419, %v1150
    %1173 = vst.msk [vmem:[#allocation2 + $0x50] sm:$0xff] %vm419, %v1152
    %1174 = vst.msk [vmem:[#allocation2 + $0x58] sm:$0xff] %vm419, %v1154
    %1175 = vst.msk [vmem:[#allocation2 + $0x60] sm:$0xff] %vm419, %v1156
    %1176 = vst.msk [vmem:[#allocation2 + $0x68] sm:$0xff] %vm419, %v1158
    %1177 = vst.msk [vmem:[#allocation2 + $0x70] sm:$0xff] %vm419, %v1160
    %1178 = vst.msk [vmem:[#allocation2 + $0x78] sm:$0xff] %vm419, %v1162
    %s1179 = scalar_lea.vmem %s0, 736
    %v1180 = vld [vmem:[%s1179] sm:$0xff]
    %v1181 = vld [vmem:[%s1179 + $0x10] sm:$0xff]
    %v1182 = vld [vmem:[%s1179 + $0x20] sm:$0xff]
    %v1183 = vld [vmem:[%s1179 + $0x30] sm:$0xff]
    %v1184 = vld [vmem:[%s1179 + $0x40] sm:$0xff]
    %v1185 = vld [vmem:[%s1179 + $0x50] sm:$0xff]
    %v1186 = vld [vmem:[%s1179 + $0x60] sm:$0xff]
    %v1187 = vld [vmem:[%s1179 + $0x70] sm:$0xff]
    %1196 = vrot.lane.b32.xlu0 %v1180, 36
    %v1197 = vpop.permute.xlu0 %1196
    %1198 = vrot.lane.b32.xlu0 %v1181, 36
    %v1199 = vpop.permute.xlu0 %1198
    %1200 = vrot.lane.b32.xlu0 %v1182, 36
    %v1201 = vpop.permute.xlu0 %1200
    %1202 = vrot.lane.b32.xlu0 %v1183, 36
    %v1203 = vpop.permute.xlu0 %1202
    %1204 = vrot.lane.b32.xlu0 %v1184, 36
    %v1205 = vpop.permute.xlu0 %1204
    %1206 = vrot.lane.b32.xlu0 %v1185, 36
    %v1207 = vpop.permute.xlu0 %1206
    %1208 = vrot.lane.b32.xlu0 %v1186, 36
    %v1209 = vpop.permute.xlu0 %1208
    %1210 = vrot.lane.b32.xlu0 %v1187, 36
    %v1211 = vpop.permute.xlu0 %1210
    %1220 = vst.msk [vmem:[#allocation2 + $0x40] sm:$0xff] %vm469, %v1197
    %1221 = vst.msk [vmem:[#allocation2 + $0x48] sm:$0xff] %vm469, %v1199
    %1222 = vst.msk [vmem:[#allocation2 + $0x50] sm:$0xff] %vm469, %v1201
    %1223 = vst.msk [vmem:[#allocation2 + $0x58] sm:$0xff] %vm469, %v1203
    %1224 = vst.msk [vmem:[#allocation2 + $0x60] sm:$0xff] %vm469, %v1205
    %1225 = vst.msk [vmem:[#allocation2 + $0x68] sm:$0xff] %vm469, %v1207
    %1226 = vst.msk [vmem:[#allocation2 + $0x70] sm:$0xff] %vm469, %v1209
    %1227 = vst.msk [vmem:[#allocation2 + $0x78] sm:$0xff] %vm469, %v1211
    %v1228 = vld [vmem:[%s1130 + $0x1] sm:$0xff]
    %v1229 = vld [vmem:[%s1130 + $0x11] sm:$0xff]
    %v1230 = vld [vmem:[%s1130 + $0x21] sm:$0xff]
    %v1231 = vld [vmem:[%s1130 + $0x31] sm:$0xff]
    %v1232 = vld [vmem:[%s1130 + $0x41] sm:$0xff]
    %v1233 = vld [vmem:[%s1130 + $0x51] sm:$0xff]
    %v1234 = vld [vmem:[%s1130 + $0x61] sm:$0xff]
    %v1235 = vld [vmem:[%s1130 + $0x71] sm:$0xff]
    %1244 = vrot.lane.b32.xlu0 %v1228, 40
    %v1245 = vpop.permute.xlu0 %1244
    %1246 = vrot.lane.b32.xlu0 %v1229, 40
    %v1247 = vpop.permute.xlu0 %1246
    %1248 = vrot.lane.b32.xlu0 %v1230, 40
    %v1249 = vpop.permute.xlu0 %1248
    %1250 = vrot.lane.b32.xlu0 %v1231, 40
    %v1251 = vpop.permute.xlu0 %1250
    %1252 = vrot.lane.b32.xlu0 %v1232, 40
    %v1253 = vpop.permute.xlu0 %1252
    %1254 = vrot.lane.b32.xlu0 %v1233, 40
    %v1255 = vpop.permute.xlu0 %1254
    %1256 = vrot.lane.b32.xlu0 %v1234, 40
    %v1257 = vpop.permute.xlu0 %1256
    %1258 = vrot.lane.b32.xlu0 %v1235, 40
    %v1259 = vpop.permute.xlu0 %1258
    %1268 = vst.msk [vmem:[#allocation2 + $0x40] sm:$0xff] %vm518, %v1245
    %1269 = vst.msk [vmem:[#allocation2 + $0x48] sm:$0xff] %vm518, %v1247
    %1270 = vst.msk [vmem:[#allocation2 + $0x50] sm:$0xff] %vm518, %v1249
    %1271 = vst.msk [vmem:[#allocation2 + $0x58] sm:$0xff] %vm518, %v1251
    %1272 = vst.msk [vmem:[#allocation2 + $0x60] sm:$0xff] %vm518, %v1253
    %1273 = vst.msk [vmem:[#allocation2 + $0x68] sm:$0xff] %vm518, %v1255
    %1274 = vst.msk [vmem:[#allocation2 + $0x70] sm:$0xff] %vm518, %v1257
    %1275 = vst.msk [vmem:[#allocation2 + $0x78] sm:$0xff] %vm518, %v1259
    %v1276 = vld [vmem:[%s1179 + $0x1] sm:$0xff]
    %v1277 = vld [vmem:[%s1179 + $0x11] sm:$0xff]
    %v1278 = vld [vmem:[%s1179 + $0x21] sm:$0xff]
    %v1279 = vld [vmem:[%s1179 + $0x31] sm:$0xff]
    %v1280 = vld [vmem:[%s1179 + $0x41] sm:$0xff]
    %v1281 = vld [vmem:[%s1179 + $0x51] sm:$0xff]
    %v1282 = vld [vmem:[%s1179 + $0x61] sm:$0xff]
    %v1283 = vld [vmem:[%s1179 + $0x71] sm:$0xff]
    %1292 = vrot.lane.b32.xlu0 %v1276, 44
    %v1293 = vpop.permute.xlu0 %1292
    %1294 = vrot.lane.b32.xlu0 %v1277, 44
    %v1295 = vpop.permute.xlu0 %1294
    %1296 = vrot.lane.b32.xlu0 %v1278, 44
    %v1297 = vpop.permute.xlu0 %1296
    %1298 = vrot.lane.b32.xlu0 %v1279, 44
    %v1299 = vpop.permute.xlu0 %1298
    %1300 = vrot.lane.b32.xlu0 %v1280, 44
    %v1301 = vpop.permute.xlu0 %1300
    %1302 = vrot.lane.b32.xlu0 %v1281, 44
    %v1303 = vpop.permute.xlu0 %1302
    %1304 = vrot.lane.b32.xlu0 %v1282, 44
    %v1305 = vpop.permute.xlu0 %1304
    %1306 = vrot.lane.b32.xlu0 %v1283, 44
    %v1307 = vpop.permute.xlu0 %1306
    %1316 = vst.msk [vmem:[#allocation2 + $0x40] sm:$0xff] %vm567, %v1293
    %1317 = vst.msk [vmem:[#allocation2 + $0x48] sm:$0xff] %vm567, %v1295
    %1318 = vst.msk [vmem:[#allocation2 + $0x50] sm:$0xff] %vm567, %v1297
    %1319 = vst.msk [vmem:[#allocation2 + $0x58] sm:$0xff] %vm567, %v1299
    %1320 = vst.msk [vmem:[#allocation2 + $0x60] sm:$0xff] %vm567, %v1301
    %1321 = vst.msk [vmem:[#allocation2 + $0x68] sm:$0xff] %vm567, %v1303
    %1322 = vst.msk [vmem:[#allocation2 + $0x70] sm:$0xff] %vm567, %v1305
    %1323 = vst.msk [vmem:[#allocation2 + $0x78] sm:$0xff] %vm567, %v1307
    %s1324 = scalar_lea.vmem %s0, 880
    %v1325 = vld [vmem:[%s1324] sm:$0xff]
    %v1326 = vld [vmem:[%s1324 + $0x10] sm:$0xff]
    %v1327 = vld [vmem:[%s1324 + $0x20] sm:$0xff]
    %v1328 = vld [vmem:[%s1324 + $0x30] sm:$0xff]
    %v1329 = vld [vmem:[%s1324 + $0x40] sm:$0xff]
    %v1330 = vld [vmem:[%s1324 + $0x50] sm:$0xff]
    %v1331 = vld [vmem:[%s1324 + $0x60] sm:$0xff]
    %v1332 = vld [vmem:[%s1324 + $0x70] sm:$0xff]
    %1341 = vrot.lane.b32.xlu0 %v1325, 48
    %v1342 = vpop.permute.xlu0 %1341
    %1343 = vrot.lane.b32.xlu0 %v1326, 48
    %v1344 = vpop.permute.xlu0 %1343
    %1345 = vrot.lane.b32.xlu0 %v1327, 48
    %v1346 = vpop.permute.xlu0 %1345
    %1347 = vrot.lane.b32.xlu0 %v1328, 48
    %v1348 = vpop.permute.xlu0 %1347
    %1349 = vrot.lane.b32.xlu0 %v1329, 48
    %v1350 = vpop.permute.xlu0 %1349
    %1351 = vrot.lane.b32.xlu0 %v1330, 48
    %v1352 = vpop.permute.xlu0 %1351
    %1353 = vrot.lane.b32.xlu0 %v1331, 48
    %v1354 = vpop.permute.xlu0 %1353
    %1355 = vrot.lane.b32.xlu0 %v1332, 48
    %v1356 = vpop.permute.xlu0 %1355
    %1365 = vst.msk [vmem:[#allocation2 + $0x40] sm:$0xff] %vm617, %v1342
    %1366 = vst.msk [vmem:[#allocation2 + $0x48] sm:$0xff] %vm617, %v1344
    %1367 = vst.msk [vmem:[#allocation2 + $0x50] sm:$0xff] %vm617, %v1346
    %1368 = vst.msk [vmem:[#allocation2 + $0x58] sm:$0xff] %vm617, %v1348
    %1369 = vst.msk [vmem:[#allocation2 + $0x60] sm:$0xff] %vm617, %v1350
    %1370 = vst.msk [vmem:[#allocation2 + $0x68] sm:$0xff] %vm617, %v1352
    %1371 = vst.msk [vmem:[#allocation2 + $0x70] sm:$0xff] %vm617, %v1354
    %1372 = vst.msk [vmem:[#allocation2 + $0x78] sm:$0xff] %vm617, %v1356
    %s1373 = scalar_lea.vmem %s0, 1024
    %v1374 = vld [vmem:[%s1373] sm:$0xff]
    %v1375 = vld [vmem:[%s1373 + $0x10] sm:$0xff]
    %v1376 = vld [vmem:[%s1373 + $0x20] sm:$0xff]
    %v1377 = vld [vmem:[%s1373 + $0x30] sm:$0xff]
    %v1378 = vld [vmem:[%s1373 + $0x40] sm:$0xff]
    %v1379 = vld [vmem:[%s1373 + $0x50] sm:$0xff]
    %v1380 = vld [vmem:[%s1373 + $0x60] sm:$0xff]
    %v1381 = vld [vmem:[%s1373 + $0x70] sm:$0xff]
    %1390 = vrot.lane.b32.xlu0 %v1374, 52
    %v1391 = vpop.permute.xlu0 %1390
    %1392 = vrot.lane.b32.xlu0 %v1375, 52
    %v1393 = vpop.permute.xlu0 %1392
    %1394 = vrot.lane.b32.xlu0 %v1376, 52
    %v1395 = vpop.permute.xlu0 %1394
    %1396 = vrot.lane.b32.xlu0 %v1377, 52
    %v1397 = vpop.permute.xlu0 %1396
    %1398 = vrot.lane.b32.xlu0 %v1378, 52
    %v1399 = vpop.permute.xlu0 %1398
    %1400 = vrot.lane.b32.xlu0 %v1379, 52
    %v1401 = vpop.permute.xlu0 %1400
    %1402 = vrot.lane.b32.xlu0 %v1380, 52
    %v1403 = vpop.permute.xlu0 %1402
    %1404 = vrot.lane.b32.xlu0 %v1381, 52
    %v1405 = vpop.permute.xlu0 %1404
    %1414 = vst.msk [vmem:[#allocation2 + $0x40] sm:$0xff] %vm667, %v1391
    %1415 = vst.msk [vmem:[#allocation2 + $0x48] sm:$0xff] %vm667, %v1393
    %1416 = vst.msk [vmem:[#allocation2 + $0x50] sm:$0xff] %vm667, %v1395
    %1417 = vst.msk [vmem:[#allocation2 + $0x58] sm:$0xff] %vm667, %v1397
    %1418 = vst.msk [vmem:[#allocation2 + $0x60] sm:$0xff] %vm667, %v1399
    %1419 = vst.msk [vmem:[#allocation2 + $0x68] sm:$0xff] %vm667, %v1401
    %1420 = vst.msk [vmem:[#allocation2 + $0x70] sm:$0xff] %vm667, %v1403
    %1421 = vst.msk [vmem:[#allocation2 + $0x78] sm:$0xff] %vm667, %v1405
    %v1422 = vld [vmem:[%s1324 + $0x1] sm:$0xff]
    %v1423 = vld [vmem:[%s1324 + $0x11] sm:$0xff]
    %v1424 = vld [vmem:[%s1324 + $0x21] sm:$0xff]
    %v1425 = vld [vmem:[%s1324 + $0x31] sm:$0xff]
    %v1426 = vld [vmem:[%s1324 + $0x41] sm:$0xff]
    %v1427 = vld [vmem:[%s1324 + $0x51] sm:$0xff]
    %v1428 = vld [vmem:[%s1324 + $0x61] sm:$0xff]
    %v1429 = vld [vmem:[%s1324 + $0x71] sm:$0xff]
    %1438 = vrot.lane.b32.xlu0 %v1422, 56
    %v1439 = vpop.permute.xlu0 %1438
    %1440 = vrot.lane.b32.xlu0 %v1423, 56
    %v1441 = vpop.permute.xlu0 %1440
    %1442 = vrot.lane.b32.xlu0 %v1424, 56
    %v1443 = vpop.permute.xlu0 %1442
    %1444 = vrot.lane.b32.xlu0 %v1425, 56
    %v1445 = vpop.permute.xlu0 %1444
    %1446 = vrot.lane.b32.xlu0 %v1426, 56
    %v1447 = vpop.permute.xlu0 %1446
    %1448 = vrot.lane.b32.xlu0 %v1427, 56
    %v1449 = vpop.permute.xlu0 %1448
    %1450 = vrot.lane.b32.xlu0 %v1428, 56
    %v1451 = vpop.permute.xlu0 %1450
    %1452 = vrot.lane.b32.xlu0 %v1429, 56
    %v1453 = vpop.permute.xlu0 %1452
    %1462 = vst.msk [vmem:[#allocation2 + $0x40] sm:$0xff] %vm716, %v1439
    %1463 = vst.msk [vmem:[#allocation2 + $0x48] sm:$0xff] %vm716, %v1441
    %1464 = vst.msk [vmem:[#allocation2 + $0x50] sm:$0xff] %vm716, %v1443
    %1465 = vst.msk [vmem:[#allocation2 + $0x58] sm:$0xff] %vm716, %v1445
    %1466 = vst.msk [vmem:[#allocation2 + $0x60] sm:$0xff] %vm716, %v1447
    %1467 = vst.msk [vmem:[#allocation2 + $0x68] sm:$0xff] %vm716, %v1449
    %1468 = vst.msk [vmem:[#allocation2 + $0x70] sm:$0xff] %vm716, %v1451
    %1469 = vst.msk [vmem:[#allocation2 + $0x78] sm:$0xff] %vm716, %v1453
    %v1470 = vld [vmem:[%s1373 + $0x1] sm:$0xff]
    %v1471 = vld [vmem:[%s1373 + $0x11] sm:$0xff]
    %v1472 = vld [vmem:[%s1373 + $0x21] sm:$0xff]
    %v1473 = vld [vmem:[%s1373 + $0x31] sm:$0xff]
    %v1474 = vld [vmem:[%s1373 + $0x41] sm:$0xff]
    %v1475 = vld [vmem:[%s1373 + $0x51] sm:$0xff]
    %v1476 = vld [vmem:[%s1373 + $0x61] sm:$0xff]
    %v1477 = vld [vmem:[%s1373 + $0x71] sm:$0xff]
    %1486 = vrot.lane.b32.xlu0 %v1470, 60
    %v1487 = vpop.permute.xlu0 %1486
    %1488 = vrot.lane.b32.xlu0 %v1471, 60
    %v1489 = vpop.permute.xlu0 %1488
    %1490 = vrot.lane.b32.xlu0 %v1472, 60
    %v1491 = vpop.permute.xlu0 %1490
    %1492 = vrot.lane.b32.xlu0 %v1473, 60
    %v1493 = vpop.permute.xlu0 %1492
    %1494 = vrot.lane.b32.xlu0 %v1474, 60
    %v1495 = vpop.permute.xlu0 %1494
    %1496 = vrot.lane.b32.xlu0 %v1475, 60
    %v1497 = vpop.permute.xlu0 %1496
    %1498 = vrot.lane.b32.xlu0 %v1476, 60
    %v1499 = vpop.permute.xlu0 %1498
    %1500 = vrot.lane.b32.xlu0 %v1477, 60
    %v1501 = vpop.permute.xlu0 %1500
    %1510 = vst.msk [vmem:[#allocation2 + $0x40] sm:$0xff] %vm765, %v1487
    %1511 = vst.msk [vmem:[#allocation2 + $0x48] sm:$0xff] %vm765, %v1489
    %1512 = vst.msk [vmem:[#allocation2 + $0x50] sm:$0xff] %vm765, %v1491
    %1513 = vst.msk [vmem:[#allocation2 + $0x58] sm:$0xff] %vm765, %v1493
    %1514 = vst.msk [vmem:[#allocation2 + $0x60] sm:$0xff] %vm765, %v1495
    %1515 = vst.msk [vmem:[#allocation2 + $0x68] sm:$0xff] %vm765, %v1497
    %1516 = vst.msk [vmem:[#allocation2 + $0x70] sm:$0xff] %vm765, %v1499
    %1517 = vst.msk [vmem:[#allocation2 + $0x78] sm:$0xff] %vm765, %v1501
    %v1518 = vld [vmem:[%s1] sm:$0xff]
    %v1519 = vld [vmem:[#allocation2] sm:$0xff]
    %v1520 = vld [vmem:[#allocation2 + $0x8] sm:$0xff]
    %v1521 = vld [vmem:[#allocation2 + $0x10] sm:$0xff]
    %v1522 = vld [vmem:[#allocation2 + $0x18] sm:$0xff]
    %v1523 = vld [vmem:[#allocation2 + $0x20] sm:$0xff]
    %v1524 = vld [vmem:[#allocation2 + $0x28] sm:$0xff]
    %v1525 = vld [vmem:[#allocation2 + $0x30] sm:$0xff]
    %v1526 = vld [vmem:[#allocation2 + $0x38] sm:$0xff]
    %v1527 = vld [vmem:[#allocation2 + $0x40] sm:$0xff]
    %v1528 = vld [vmem:[#allocation2 + $0x48] sm:$0xff]
    %v1529 = vld [vmem:[#allocation2 + $0x50] sm:$0xff]
    %v1530 = vld [vmem:[#allocation2 + $0x58] sm:$0xff]
    %v1531 = vld [vmem:[#allocation2 + $0x60] sm:$0xff]
    %v1532 = vld [vmem:[#allocation2 + $0x68] sm:$0xff]
    %v1533 = vld [vmem:[#allocation2 + $0x70] sm:$0xff]
    %v1534 = vld [vmem:[#allocation2 + $0x78] sm:$0xff]
    %v1535 = vld [vmem:[%s2] sm:$0xff]
    %1537 = vset.pattern.permute.xlu0 0
    %1538 = vperm.xlu0 %1537, %v1535
    %v1539 = vpop.permute.xlu0 %1538
    %vm1541 = vcmask 523264
    %v1543 = vsel %vm1541, %v1518, 0
    %v1546 = vsel %vm1541, %v1519, 0
    %v1549 = vsel %vm1541, %v1520, 0
    %v1552 = vsel %vm1541, %v1521, 0
    %v1555 = vsel %vm1541, %v1522, 0
    %v1558 = vsel %vm1541, %v1523, 0
    %v1561 = vsel %vm1541, %v1524, 0
    %v1564 = vsel %vm1541, %v1525, 0
    %v1567 = vsel %vm1541, %v1526, 0
    %v1570 = vsel %vm1541, %v1527, 0
    %v1573 = vsel %vm1541, %v1528, 0
    %v1576 = vsel %vm1541, %v1529, 0
    %v1579 = vsel %vm1541, %v1530, 0
    %v1582 = vsel %vm1541, %v1531, 0
    %v1585 = vsel %vm1541, %v1532, 0
    %v1588 = vsel %vm1541, %v1533, 0
    %v1591 = vsel %vm1541, %v1534, 0
    %1593 = vmatprep.subr.mxu0 0.0
    %1594 = vmatpush1.xpose.msra.mxu0 %v1591
    %1595 = vmatprep.subr.mxu0 0.0
    %1596 = vmatpush1.xpose.msra.mxu0 %v1588
    %1597 = vmatprep.subr.mxu0 0.0
    %1598 = vmatpush1.xpose.msra.mxu0 %v1585
    %1599 = vmatprep.subr.mxu0 0.0
    %1600 = vmatpush1.xpose.msra.mxu0 %v1582
    %1601 = vmatprep.subr.mxu0 0.0
    %1602 = vmatpush1.xpose.msra.mxu0 %v1579
    %1603 = vmatprep.subr.mxu0 0.0
    %1604 = vmatpush1.xpose.msra.mxu0 %v1576
    %1605 = vmatprep.subr.mxu0 0.0
    %1606 = vmatpush1.xpose.msra.mxu0 %v1573
    %1607 = vmatprep.subr.mxu0 0.0
    %1608 = vmatpush1.xpose.msra.mxu0 %v1570
    %1609 = vmatprep.subr.mxu0 0.0
    %1610 = vmatpush1.xpose.msra.mxu0 %v1567
    %1611 = vmatprep.subr.mxu0 0.0
    %1612 = vmatpush1.xpose.msra.mxu0 %v1564
    %1613 = vmatprep.subr.mxu0 0.0
    %1614 = vmatpush1.xpose.msra.mxu0 %v1561
    %1615 = vmatprep.subr.mxu0 0.0
    %1616 = vmatpush1.xpose.msra.mxu0 %v1558
    %1617 = vmatprep.subr.mxu0 0.0
    %1618 = vmatpush1.xpose.msra.mxu0 %v1555
    %1619 = vmatprep.subr.mxu0 0.0
    %1620 = vmatpush1.xpose.msra.mxu0 %v1552
    %1621 = vmatprep.subr.mxu0 0.0
    %1622 = vmatpush1.xpose.msra.mxu0 %v1549
    %1623 = vmatprep.subr.mxu0 0.0
    %1624 = vmatpush1.xpose.msra.mxu0 %v1546
    %1625 = vmatprep.subr.mxu0 0.0
    %1626 = vmatpush2.xpose.msra.mxu0 0.0
    %1627 = vmatprep.subr.mxu0 0.0
    %1628 = vmatpush2.xpose.msra.mxu0 0.0
    %1629 = vmatprep.subr.mxu0 0.0
    %1630 = vmatpush2.xpose.msra.mxu0 0.0
    %1631 = vmatprep.subr.mxu0 0.0
    %1632 = vmatpush2.xpose.msra.mxu0 0.0
    %1633 = vmatprep.subr.mxu0 0.0
    %1634 = vmatpush2.xpose.msra.mxu0 0.0
    %1635 = vmatprep.subr.mxu0 0.0
    %1636 = vmatpush2.xpose.msra.mxu0 0.0
    %1637 = vmatprep.subr.mxu0 0.0
    %1638 = vmatpush2.xpose.msra.mxu0 0.0
    %1639 = vmatprep.subr.mxu0 0.0
    %1640 = vmatpush2.xpose.msra.mxu0 0.0
    %1641 = vmatprep.subr.mxu0 0.0
    %1642 = vmatpush2.xpose.msra.mxu0 0.0
    %1643 = vmatprep.subr.mxu0 0.0
    %1644 = vmatpush2.xpose.msra.mxu0 0.0
    %1645 = vmatprep.subr.mxu0 0.0
    %1646 = vmatpush2.xpose.msra.mxu0 0.0
    %1647 = vmatprep.subr.mxu0 0.0
    %1648 = vmatpush2.xpose.msra.mxu0 0.0
    %1649 = vmatprep.subr.mxu0 0.0
    %1650 = vmatpush2.xpose.msra.mxu0 0.0
    %1651 = vmatprep.subr.mxu0 0.0
    %1652 = vmatpush2.xpose.msra.mxu0 0.0
    %1653 = vmatprep.subr.mxu0 0.0
    %1654 = vmatpush2.xpose.msra.mxu0 0.0
    %1655 = vmatprep.subr.mxu0 0.0
    %1656 = vmatpush2.xpose.msra.mxu0 0.0
    %1657 = vmatprep.mubr.f32.mxu0 0.0
    %1658 = vmatmul.mubr.f32.gmra.mxu0 %v1543
    %v1659 = vpop.f32.mrf.mxu0
    %v1660 = vadd.f32 %v1539, %v1659
    %v1661 = vpop.f32.mrf.mxu0
    %1662 = vdwg.mxu0
    %1663 = vst [vmem:[#allocation3] sm:$0xff] %v1660
    // Predicated region
    $region14: #{tpu_custom_call.1} parent=1 // pred_check
      _
    $region15: #{tpu_custom_call.1} parent=1 // pred_check_branch
      %1665 = sbr.rel (0) target = $region17
    $region16: #{tpu_custom_call.1} parent=1 // pred_region
      %s1667 = ssub.s32 128, 128
      %1668 = vsyncadd [#allocation4], %s1667
      %s1670 = sshll.u32 [#allocation3], 4
      %s1671 = int_to_ptr.vmem [resolvable:$true] %s1670
      %1673 = dma.vmem_to_hbm [thread:$0]  %s1671, 128, %s3, [#allocation4]
    $region17: #{tpu_custom_call.1} parent=1 // pred_fallthru
      _
    // Predicated region
    $region18: #{tpu_custom_call.1} parent=1 // pred_check
      _
    $region19: #{tpu_custom_call.1} parent=1 // pred_check_branch
      %1675 = sbr.rel (0) target = $region21
    $region20: #{tpu_custom_call.1} parent=1 // pred_region
      %1676 = dma.done [#allocation4], 128
    $region21: #{tpu_custom_call.1} parent=1 // pred_fallthru
      _
    %1677 = vsyncpa [#allocation4], 1

</llo_original>
